<compile_context>
chip_gen: v7x
topology: tpu7x:2x2x1
jax: 0.10.0
libtpu: 0.0.40
codegen_flags: <defaults>
</compile_context>

<pallas_src>
import jax
import jax.numpy as jnp
from jax.experimental import pallas as pl
from jax.experimental.pallas import tpu as pltpu

LANE = 128                                   # one padded lane-tile per gate
PRECISION = jax.lax.Precision.HIGHEST        # full-f32 MXU contraction


# --------------------------------------------------------------------------
# Shared cell math (used by both kernels).
# --------------------------------------------------------------------------
def _lstm_cell_step(x, h_prev, c_prev, wg_ref, wl_ref):
    """One LSTM cell update + linear head, all operands already in VMEM.

    x:       (B, I) float32
    h_prev:  (B, H) float32
    c_prev:  (B, H) float32
    wg_ref:  (I+H+1, 4*LANE)  rows [0,I)=W_ih^T, [I,I+H)=W_hh^T, row I+H=b_ih+b_hh,
             each gate (PyTorch order i,f,g,o) zero-padded to its own 128-lane tile
    wl_ref:  (H+1, I)         rows [0,H)=W_lin^T, row H=b_lin
    returns (out (B, I), h_new (B, H), c_new (B, H))
    """
    I = x.shape[1]
    H = h_prev.shape[1]

    # [x, h] combine done on the MXU (two pushes) — no concatenate anywhere.
    gates = (
        jnp.dot(x, wg_ref[0:I, :],
                preferred_element_type=jnp.float32, precision=PRECISION)
        + jnp.dot(h_prev, wg_ref[I:I + H, :],
                  preferred_element_type=jnp.float32, precision=PRECISION)
        + wg_ref[I + H:I + H + 1, :]            # folded b_ih + b_hh (broadcast row)
    )

    # Each gate slice starts on a 128-lane vreg boundary (no cross-lane moves).
    i_g = jax.nn.sigmoid(gates[:, 0 * LANE:0 * LANE + H])
    f_g = jax.nn.sigmoid(gates[:, 1 * LANE:1 * LANE + H])
    g_g = jnp.tanh(gates[:, 2 * LANE:2 * LANE + H])
    o_g = jax.nn.sigmoid(gates[:, 3 * LANE:3 * LANE + H])

    c_new = f_g * c_prev + i_g * g_g
    h_new = o_g * jnp.tanh(c_new)

    out = (
        jnp.dot(h_new, wl_ref[0:H, :],
                preferred_element_type=jnp.float32, precision=PRECISION)
        + wl_ref[H:H + 1, :]                    # folded linear bias
    )
    return out, h_new, c_new


# --------------------------------------------------------------------------
# Kernel 1: single step (exact nn.Module.forward semantics).
# --------------------------------------------------------------------------
def lstm_decoder_step_kernel(x_ref, h0_ref, c0_ref, wg_ref, wl_ref,
                             out_ref, h1_ref, c1_ref):
    x = x_ref[...]                # (B, I)
    h0 = h0_ref[0]                # (B, H)  -- leading num_layers dim squeezed in-kernel
    c0 = c0_ref[0]                # (B, H)
    out, h1, c1 = _lstm_cell_step(x, h0, c0, wg_ref, wl_ref)
    out_ref[...] = out
    h1_ref[...] = h1
    c1_ref[...] = c1


# --------------------------------------------------------------------------
# Kernel 2: T decode steps inside ONE pallas_call (feedback item #1).
#   grid=(T,) sequential ("arbitrary"); weights resident in VMEM (constant
#   index_map); h/c carried in VMEM scratch; per-step output streamed out.
# --------------------------------------------------------------------------
def lstm_decoder_seq_kernel(x_ref, h0_ref, c0_ref, wg_ref, wl_ref,
                            out_ref, hT_ref, cT_ref, h_sc, c_sc):
    t = pl.program_id(0)

    @pl.when(t == 0)
    def _():
        h_sc[...] = h0_ref[0]
        c_sc[...] = c0_ref[0]

    out, h_new, c_new = _lstm_cell_step(x_ref[0], h_sc[...], c_sc[...],
                                        wg_ref, wl_ref)
    h_sc[...] = h_new
    c_sc[...] = c_new

    out_ref[0] = out              # (1, B, I) block indexed by t
    # Constant-index output blocks: stay VMEM-resident, written back once at end.
    hT_ref[...] = h_new
    cT_ref[...] = c_new


# --------------------------------------------------------------------------
# One-time parameter preprocessing (hoisted out of the per-step path).
# --------------------------------------------------------------------------
def prepare_lstm_decoder_params(params):
    """params = (w_ih (4H,I), w_hh (4H,H), b_ih (4H,), b_hh (4H,),
                 w_lin (I,H), b_lin (I,))  ->  (gate slab, linear slab)."""
    w_ih, w_hh, b_ih, b_hh, w_lin, b_lin = params
    H = w_hh.shape[1]
    I = w_ih.shape[1]
    assert H <= LANE and I <= LANE

    # Gate slab: rows [0,I)=W_ih^T, [I,I+H)=W_hh^T, row I+H = b_ih+b_hh;
    # PyTorch gate order i,f,g,o, each gate padded to its own 128-lane tile.
    wg = jnp.zeros((I + H + 1, 4 * LANE), jnp.float32)
    b_sum = (b_ih + b_hh).astype(jnp.float32)
    for g in range(4):
        wg = wg.at[:I, g * LANE:g * LANE + H].set(
            w_ih[g * H:(g + 1) * H, :].T.astype(jnp.float32))
        wg = wg.at[I:I + H, g * LANE:g * LANE + H].set(
            w_hh[g * H:(g + 1) * H, :].T.astype(jnp.float32))
        wg = wg.at[I + H, g * LANE:g * LANE + H].set(b_sum[g * H:(g + 1) * H])

    # Linear slab: rows [0,H)=W_lin^T, row H = b_lin.
    wl = jnp.zeros((H + 1, I), jnp.float32)
    wl = wl.at[:H, :].set(w_lin.T.astype(jnp.float32))
    wl = wl.at[H, :].set(b_lin.astype(jnp.float32))
    return wg, wl


# --------------------------------------------------------------------------
# Wrappers.
# --------------------------------------------------------------------------
@jax.jit
def lstm_decoder_forward(x_input, encoder_hidden_states, prepared_params):
    """Pallas-backed forward matching the PyTorch module (single step)."""
    wg, wl = prepared_params
    h0, c0 = encoder_hidden_states
    B, I = x_input.shape
    H = h0.shape[-1]

    vmem = pl.BlockSpec(memory_space=pltpu.MemorySpace.VMEM)
    out2d, h1, c1 = pl.pallas_call(
        lstm_decoder_step_kernel,
        out_shape=(
            jax.ShapeDtypeStruct((B, I), jnp.float32),
            jax.ShapeDtypeStruct((B, H), jnp.float32),
            jax.ShapeDtypeStruct((B, H), jnp.float32),
        ),
        in_specs=[vmem] * 5,
        out_specs=(vmem, vmem, vmem),
    )(x_input.astype(jnp.float32), h0.astype(jnp.float32),
      c0.astype(jnp.float32), wg, wl)

    # Shape-only glue to match the module's return signature (fused under jit).
    return out2d[:, None, :], (h1[None], c1[None])


@jax.jit
def lstm_decoder_decode(x_seq, encoder_hidden_states, prepared_params):
    """T teacher-forced decoder steps in ONE pallas_call.

    x_seq: (T, B, I).  Returns (outputs (T, B, I), (hT (1,B,H), cT (1,B,H))),
    identical to calling the module's forward() T times feeding (h, c) through.
    """
    wg, wl = prepared_params
    h0, c0 = encoder_hidden_states
    T, B, I = x_seq.shape
    H = h0.shape[-1]

    grid_spec = pltpu.PrefetchScalarGridSpec(
        num_scalar_prefetch=0,
        grid=(T,),
        in_specs=[
            pl.BlockSpec((1, B, I), lambda t: (t, 0, 0)),        # per-step input
            pl.BlockSpec((1, B, H), lambda t: (0, 0, 0)),        # h0 (DMA'd once)
            pl.BlockSpec((1, B, H), lambda t: (0, 0, 0)),        # c0 (DMA'd once)
            pl.BlockSpec((I + H + 1, 4 * LANE), lambda t: (0, 0)),  # gate slab, resident
            pl.BlockSpec((H + 1, I), lambda t: (0, 0)),          # linear slab, resident
        ],
        out_specs=(
            pl.BlockSpec((1, B, I), lambda t: (t, 0, 0)),        # streamed per-step out
            pl.BlockSpec((B, H), lambda t: (0, 0)),              # final h
            pl.BlockSpec((B, H), lambda t: (0, 0)),              # final c
        ),
        scratch_shapes=[pltpu.VMEM((B, H), jnp.float32),         # carried h
                        pltpu.VMEM((B, H), jnp.float32)],        # carried c
    )
    outs, hT, cT = pl.pallas_call(
        lstm_decoder_seq_kernel,
        grid_spec=grid_spec,
        out_shape=(
            jax.ShapeDtypeStruct((T, B, I), jnp.float32),
            jax.ShapeDtypeStruct((B, H), jnp.float32),
            jax.ShapeDtypeStruct((B, H), jnp.float32),
        ),
        compiler_params=pltpu.CompilerParams(
            dimension_semantics=("arbitrary",)),   # steps are sequentially dependent
    )(x_seq.astype(jnp.float32), h0.astype(jnp.float32),
      c0.astype(jnp.float32), wg, wl)
    return outs, (hT[None], cT[None])


# --------------------------------------------------------------------------
# Pure-JAX references.
# --------------------------------------------------------------------------
def lstm_decoder_reference(x_input, encoder_hidden_states, params):
    w_ih, w_hh, b_ih, b_hh, w_lin, b_lin = params
    h0, c0 = encoder_hidden_states
    H = h0.shape[-1]
    h0_2d, c0_2d = h0[0], c0[0]
    gates = (jnp.dot(x_input, w_ih.T, precision=PRECISION)
             + jnp.dot(h0_2d, w_hh.T, precision=PRECISION)
             + b_ih + b_hh)
    i_g = jax.nn.sigmoid(gates[:, 0 * H:1 * H])
    f_g = jax.nn.sigmoid(gates[:, 1 * H:2 * H])
    g_g = jnp.tanh(gates[:, 2 * H:3 * H])
    o_g = jax.nn.sigmoid(gates[:, 3 * H:4 * H])
    c1 = f_g * c0_2d + i_g * g_g
    h1 = o_g * jnp.tanh(c1)
    out = jnp.dot(h1, w_lin.T, precision=PRECISION) + b_lin
    return out[:, None, :], (h1[None], c1[None])


def lstm_decoder_reference_decode(x_seq, encoder_hidden_states, params):
    def step(carry, x_t):
        out, carry = lstm_decoder_reference(x_t, carry, params)
        return carry, out[:, 0, :]
    carry, outs = jax.lax.scan(step, encoder_hidden_states, x_seq)
    return outs, carry


# --------------------------------------------------------------------------
if __name__ == "__main__":
    # Shapes consistent with the module: hidden_size=16, input_size=8, batch=8.
    hidden_size = 16
    input_size = 8
    batch = 8
    decode_len = 6

    key = jax.random.PRNGKey(0)
    keys = jax.random.split(key, 10)
    bound = 1.0 / (hidden_size ** 0.5)

    # PyTorch-style uniform(-1/sqrt(H), 1/sqrt(H)) init, deterministic.
    w_ih = jax.random.uniform(keys[0], (4 * hidden_size, input_size), jnp.float32, -bound, bound)
    w_hh = jax.random.uniform(keys[1], (4 * hidden_size, hidden_size), jnp.float32, -bound, bound)
    b_ih = jax.random.uniform(keys[2], (4 * hidden_size,), jnp.float32, -bound, bound)
    b_hh = jax.random.uniform(keys[3], (4 * hidden_size,), jnp.float32, -bound, bound)
    w_lin = jax.random.uniform(keys[4], (input_size, hidden_size), jnp.float32, -bound, bound)
    b_lin = jax.random.uniform(keys[5], (input_size,), jnp.float32, -bound, bound)
    params = (w_ih, w_hh, b_ih, b_hh, w_lin, b_lin)

    # One-time weight preprocessing (transpose, gate padding, bias folding).
    prepared = prepare_lstm_decoder_params(params)

    x_input = jax.random.normal(keys[6], (batch, input_size), jnp.float32)
    h0 = jax.random.normal(keys[7], (1, batch, hidden_size), jnp.float32)
    c0 = jax.random.normal(keys[8], (1, batch, hidden_size), jnp.float32)

    # 1) Single step — exact module.forward() semantics.
    output, (h1, c1) = lstm_decoder_forward(x_input, (h0, c0), prepared)
    jax.block_until_ready((output, h1, c1))

    ref_out, (ref_h1, ref_c1) = lstm_decoder_reference(x_input, (h0, c0), params)
    assert output.shape == (batch, 1, input_size)
    assert h1.shape == (1, batch, hidden_size) and c1.shape == (1, batch, hidden_size)
    assert jnp.allclose(output, ref_out, atol=2e-5)
    assert jnp.allclose(h1, ref_h1, atol=2e-5)
    assert jnp.allclose(c1, ref_c1, atol=2e-5)

    # 2) Whole decode loop inside ONE pallas_call (T sequential steps).
    x_seq = jax.random.normal(keys[9], (decode_len, batch, input_size), jnp.float32)
    outs, (hT, cT) = lstm_decoder_decode(x_seq, (h0, c0), prepared)
    jax.block_until_ready((outs, hT, cT))

    ref_outs, (ref_hT, ref_cT) = lstm_decoder_reference_decode(x_seq, (h0, c0), params)
    assert outs.shape == (decode_len, batch, input_size)
    assert jnp.allclose(outs, ref_outs, atol=1e-4)
    assert jnp.allclose(hT, ref_hT, atol=1e-4)
    assert jnp.allclose(cT, ref_cT, atol=1e-4)

    print("KERNEL_OK")
</pallas_src>

<mosaic_0001>
module attributes {stable_mosaic.version = 11 : i64} {
  func.func @lstm_decoder_step_kernel(%arg0: memref<8x8xf32, #tpu.memory_space<vmem>>, %arg1: memref<1x8x16xf32, #tpu.memory_space<vmem>>, %arg2: memref<1x8x16xf32, #tpu.memory_space<vmem>>, %arg3: memref<25x512xf32, #tpu.memory_space<vmem>>, %arg4: memref<17x8xf32, #tpu.memory_space<vmem>>, %arg5: memref<8x8xf32, #tpu.memory_space<vmem>>, %arg6: memref<8x16xf32, #tpu.memory_space<vmem>>, %arg7: memref<8x16xf32, #tpu.memory_space<vmem>>) attributes {dimension_semantics = [], scalar_prefetch = 0 : i64, scratch_operands = 0 : i64, tpu.core_type = #tpu.core_type<tc>} {
    %c0 = arith.constant 0 : index
    %c0_0 = arith.constant 0 : index
    %0 = vector.load %arg0[%c0, %c0_0] : memref<8x8xf32, #tpu.memory_space<vmem>>, vector<8x8xf32>
    %c0_1 = arith.constant 0 : index
    %c0_2 = arith.constant 0 : index
    %c0_3 = arith.constant 0 : index
    %1 = vector.load %arg1[%c0_1, %c0_2, %c0_3] : memref<1x8x16xf32, #tpu.memory_space<vmem>>, vector<1x8x16xf32>
    %2 = vector.shape_cast %1 : vector<1x8x16xf32> to vector<8x16xf32>
    %c0_4 = arith.constant 0 : index
    %c0_5 = arith.constant 0 : index
    %c0_6 = arith.constant 0 : index
    %3 = vector.load %arg2[%c0_4, %c0_5, %c0_6] : memref<1x8x16xf32, #tpu.memory_space<vmem>>, vector<1x8x16xf32>
    %4 = vector.shape_cast %3 : vector<1x8x16xf32> to vector<8x16xf32>
    %c0_7 = arith.constant 0 : index
    %c0_8 = arith.constant 0 : index
    %5 = vector.load %arg3[%c0_7, %c0_8] : memref<25x512xf32, #tpu.memory_space<vmem>>, vector<8x512xf32>
    %cst = arith.constant dense<0.000000e+00> : vector<8x512xf32>
    %6 = tpu.matmul %0, %5, %cst {dimension_numbers = #tpu.dot_dimension_numbers<[1], [0], [0], [1], [0, 0, 1, 1], [], []>, precision = #tpu.contract_precision<fp32>} : vector<8x8xf32>, vector<8x512xf32>, vector<8x512xf32> -> vector<8x512xf32>
    %c8 = arith.constant 8 : index
    %c0_9 = arith.constant 0 : index
    %7 = vector.load %arg3[%c8, %c0_9] : memref<25x512xf32, #tpu.memory_space<vmem>>, vector<16x512xf32>
    %cst_10 = arith.constant dense<0.000000e+00> : vector<8x512xf32>
    %8 = tpu.matmul %2, %7, %cst_10 {dimension_numbers = #tpu.dot_dimension_numbers<[1], [0], [0], [1], [0, 0, 1, 1], [], []>, precision = #tpu.contract_precision<fp32>} : vector<8x16xf32>, vector<16x512xf32>, vector<8x512xf32> -> vector<8x512xf32>
    %9 = arith.addf %6, %8 : vector<8x512xf32>
    %c24 = arith.constant 24 : index
    %c0_11 = arith.constant 0 : index
    %10 = vector.load %arg3[%c24, %c0_11] : memref<25x512xf32, #tpu.memory_space<vmem>>, vector<1x512xf32>
    %11 = vector.broadcast %10 : vector<1x512xf32> to vector<8x512xf32>
    %12 = arith.addf %9, %11 : vector<8x512xf32>
    %13 = vector.extract_strided_slice %12 {offsets = [0, 0], sizes = [8, 16], strides = [1, 1]} : vector<8x512xf32> to vector<8x16xf32>
    %14 = arith.negf %13 : vector<8x16xf32>
    %15 = math.exp %14 : vector<8x16xf32>
    %cst_12 = arith.constant 1.000000e+00 : f32
    %16 = vector.broadcast %cst_12 : f32 to vector<8x16xf32>
    %17 = arith.addf %16, %15 : vector<8x16xf32>
    %18 = arith.divf %16, %17 : vector<8x16xf32>
    %19 = vector.extract_strided_slice %12 {offsets = [0, 128], sizes = [8, 16], strides = [1, 1]} : vector<8x512xf32> to vector<8x16xf32>
    %20 = arith.negf %19 : vector<8x16xf32>
    %21 = math.exp %20 : vector<8x16xf32>
    %cst_13 = arith.constant 1.000000e+00 : f32
    %22 = vector.broadcast %cst_13 : f32 to vector<8x16xf32>
    %23 = arith.addf %22, %21 : vector<8x16xf32>
    %24 = arith.divf %22, %23 : vector<8x16xf32>
    %25 = vector.extract_strided_slice %12 {offsets = [0, 256], sizes = [8, 16], strides = [1, 1]} : vector<8x512xf32> to vector<8x16xf32>
    %26 = math.tanh %25 : vector<8x16xf32>
    %27 = vector.extract_strided_slice %12 {offsets = [0, 384], sizes = [8, 16], strides = [1, 1]} : vector<8x512xf32> to vector<8x16xf32>
    %28 = arith.negf %27 : vector<8x16xf32>
    %29 = math.exp %28 : vector<8x16xf32>
    %cst_14 = arith.constant 1.000000e+00 : f32
    %30 = vector.broadcast %cst_14 : f32 to vector<8x16xf32>
    %31 = arith.addf %30, %29 : vector<8x16xf32>
    %32 = arith.divf %30, %31 : vector<8x16xf32>
    %33 = arith.mulf %24, %4 : vector<8x16xf32>
    %34 = arith.mulf %18, %26 : vector<8x16xf32>
    %35 = arith.addf %33, %34 : vector<8x16xf32>
    %36 = math.tanh %35 : vector<8x16xf32>
    %37 = arith.mulf %32, %36 : vector<8x16xf32>
    %c0_15 = arith.constant 0 : index
    %c0_16 = arith.constant 0 : index
    %38 = vector.load %arg4[%c0_15, %c0_16] : memref<17x8xf32, #tpu.memory_space<vmem>>, vector<16x8xf32>
    %cst_17 = arith.constant dense<0.000000e+00> : vector<8x8xf32>
    %39 = tpu.matmul %37, %38, %cst_17 {dimension_numbers = #tpu.dot_dimension_numbers<[1], [0], [0], [1], [0, 0, 1, 1], [], []>, precision = #tpu.contract_precision<fp32>} : vector<8x16xf32>, vector<16x8xf32>, vector<8x8xf32> -> vector<8x8xf32>
    %c16 = arith.constant 16 : index
    %c0_18 = arith.constant 0 : index
    %40 = vector.load %arg4[%c16, %c0_18] : memref<17x8xf32, #tpu.memory_space<vmem>>, vector<1x8xf32>
    %41 = vector.broadcast %40 : vector<1x8xf32> to vector<8x8xf32>
    %42 = arith.addf %39, %41 : vector<8x8xf32>
    %c0_19 = arith.constant 0 : index
    %c0_20 = arith.constant 0 : index
    %43 = vector.load %arg5[%c0_19, %c0_20] : memref<8x8xf32, #tpu.memory_space<vmem>>, vector<8x8xf32>
    tpu.vector_store %arg5[%c0_19, %c0_20], %42 {strides = array<i32>} : memref<8x8xf32, #tpu.memory_space<vmem>>, vector<8x8xf32>,
    %c0_21 = arith.constant 0 : index
    %c0_22 = arith.constant 0 : index
    %44 = vector.load %arg6[%c0_21, %c0_22] : memref<8x16xf32, #tpu.memory_space<vmem>>, vector<8x16xf32>
    tpu.vector_store %arg6[%c0_21, %c0_22], %37 {strides = array<i32>} : memref<8x16xf32, #tpu.memory_space<vmem>>, vector<8x16xf32>,
    %c0_23 = arith.constant 0 : index
    %c0_24 = arith.constant 0 : index
    %45 = vector.load %arg7[%c0_23, %c0_24] : memref<8x16xf32, #tpu.memory_space<vmem>>, vector<8x16xf32>
    tpu.vector_store %arg7[%c0_23, %c0_24], %35 {strides = array<i32>} : memref<8x16xf32, #tpu.memory_space<vmem>>, vector<8x16xf32>,
    return
  }
}

</mosaic_0001>

<llo_original>
// kernel: lstm_decoder_forward.1
$region0: #{lstm_decoder_forward.1}
  #allocation0 [shape = 'u32[]', space=smem, size = 0x4, offset = 0x4, fixed_abs, tag = 'smem constant byte address 0x4 - core index']
  #allocation1 [shape = 'u32[144,128]{1,0:T(1,128)}', space=vmem, size = 0x12000, scoped, tag = 'internal scratch']
  %s0 = inlined_call_operand.vmem [shape: f32[8,8], index: 0, kind: input, shape index: {}]
  %s1 = inlined_call_operand.vmem [shape: f32[1,8,16], index: 1, kind: input, shape index: {}]
  %s2 = inlined_call_operand.vmem [shape: f32[1,8,16], index: 2, kind: input, shape index: {}]
  %s3 = inlined_call_operand.hbm [shape: f32[25,512], index: 3, kind: input, shape index: {}]
  %s4 = inlined_call_operand.vmem [shape: f32[17,8], index: 4, kind: input, shape index: {}]
  %s5 = inlined_call_operand.hbm [shape: f32[8,8], index: 5, kind: output, shape index: {0}]
  %s6 = inlined_call_operand.hbm [shape: f32[8,16], index: 6, kind: output, shape index: {1}]
  %s7 = inlined_call_operand.hbm [shape: f32[8,16], index: 7, kind: output, shape index: {2}]
  %8 = xla_tuple %s5, %s6, %s7
  %s9 = sld [smem:[#allocation0]]
  $region50: #{lstm_decoder_forward.1} parent=0
    _
  %s11 = ssub.s32 1, %s9
  %s12 = scalar_select 0, %s11, %s9
  $region1: #{lstm_decoder_forward.1} parent=0
    #allocation2 [shape = 'u8[65536]{0}', space=vmem, size = 0x10000, scoped, tag = 'input window, operand 3, single buffered']
    #allocation3 [shape = 's32[1]{0}', space=sflag, size = 0x4, scoped, tag = 'scoped memory for lstm_decoder_forward.1']
    #allocation4 [shape = 's32[1]{0}', space=sflag, size = 0x4, scoped, tag = 'scoped memory for lstm_decoder_forward.1']
    #allocation5 [shape = 'u8[4096]{0}', space=vmem, size = 0x1000, scoped, tag = 'output window, operand 0, single buffered']
    #allocation6 [shape = 'u8[4096]{0}', space=vmem, size = 0x1000, scoped, tag = 'output window, operand 1, single buffered']
    #allocation7 [shape = 's32[1]{0}', space=sflag, size = 0x4, scoped, tag = 'scoped memory for lstm_decoder_forward.1']
    #allocation8 [shape = 'u8[4096]{0}', space=vmem, size = 0x1000, scoped, tag = 'output window, operand 2, single buffered']
    %13 = vsyncpa [#allocation3], 0
    %14 = vsyncpa [#allocation4], 0
    %15 = vsyncpa [#allocation7], 0
    // Predicated region
    $region2: #{lstm_decoder_forward.1} parent=1 // pred_check
      _
    $region3: #{lstm_decoder_forward.1} parent=1 // pred_check_branch
      %17 = sbr.rel (0) target = $region5
    $region4: #{lstm_decoder_forward.1} parent=1 // pred_region
      _
    $region5: #{lstm_decoder_forward.1} parent=1 // pred_fallthru
      _
    // Predicated region
    $region6: #{lstm_decoder_forward.1} parent=1 // pred_check
      _
    $region7: #{lstm_decoder_forward.1} parent=1 // pred_check_branch
      %19 = sbr.rel (0) target = $region9
    $region8: #{lstm_decoder_forward.1} parent=1 // pred_region
      _
    $region9: #{lstm_decoder_forward.1} parent=1 // pred_fallthru
      _
    // Predicated region
    $region10: #{lstm_decoder_forward.1} parent=1 // pred_check
      _
    $region11: #{lstm_decoder_forward.1} parent=1 // pred_check_branch
      %21 = sbr.rel (0) target = $region13
    $region12: #{lstm_decoder_forward.1} parent=1 // pred_region
      _
    $region13: #{lstm_decoder_forward.1} parent=1 // pred_fallthru
      _
    // Predicated region
    $region14: #{lstm_decoder_forward.1} parent=1 // pred_check
      _
    $region15: #{lstm_decoder_forward.1} parent=1 // pred_check_branch
      %23 = sbr.rel (0) target = $region17
    $region16: #{lstm_decoder_forward.1} parent=1 // pred_region
      %s25 = ssub.s32 2048, 2048
      %26 = vsyncadd [#allocation3], %s25
      %s27 = sshll.u32 [#allocation2], 4
      %s28 = int_to_ptr.vmem [resolvable:$true] %s27
      %33 = dma.hbm_to_vmem [thread:$0]  %s3, 2048, %s28, [#allocation3], 512, 512, 32
    $region17: #{lstm_decoder_forward.1} parent=1 // pred_fallthru
      _
    // Predicated region
    $region18: #{lstm_decoder_forward.1} parent=1 // pred_check
      _
    $region19: #{lstm_decoder_forward.1} parent=1 // pred_check_branch
      %35 = sbr.rel (0) target = $region21
    $region20: #{lstm_decoder_forward.1} parent=1 // pred_region
      _
    $region21: #{lstm_decoder_forward.1} parent=1 // pred_fallthru
      _
    // Predicated region
    $region22: #{lstm_decoder_forward.1} parent=1 // pred_check
      _
    $region23: #{lstm_decoder_forward.1} parent=1 // pred_check_branch
      %37 = sbr.rel (0) target = $region25
    $region24: #{lstm_decoder_forward.1} parent=1 // pred_region
      %38 = dma.done [#allocation3], 2048
    $region25: #{lstm_decoder_forward.1} parent=1 // pred_fallthru
      _
    %v39 = vld [vmem:[%s0] sm:$0xff]
    %v40 = vld [vmem:[%s1] sm:$0xff]
    %v41 = vld [vmem:[%s2] sm:$0xff]
    %v42 = vld [vmem:[#allocation2] sm:$0xff]
    %v43 = vld [vmem:[#allocation2 + $0x8] sm:$0xff]
    %v44 = vld [vmem:[#allocation2 + $0x10] sm:$0xff]
    %v45 = vld [vmem:[#allocation2 + $0x18] sm:$0xff]
    %v46 = vld [vmem:[#allocation2 + $0x20] sm:$0xff]
    %v47 = vld [vmem:[#allocation2 + $0x28] sm:$0xff]
    %v48 = vld [vmem:[#allocation2 + $0x30] sm:$0xff]
    %v49 = vld [vmem:[#allocation2 + $0x38] sm:$0xff]
    %v50 = vld [vmem:[#allocation2 + $0x40] sm:$0xff]
    %v51 = vld [vmem:[#allocation2 + $0x48] sm:$0xff]
    %v52 = vld [vmem:[#allocation2 + $0x50] sm:$0xff]
    %v53 = vld [vmem:[#allocation2 + $0x58] sm:$0xff]
    %vm54 = vcmask 130048
    %v56 = vsel %vm54, %v40, 0
    %v58 = vand.u32 %v47, 4294901760
    %59 = vmatprep.subr.mxu0 %v58
    %v60 = vand.u32 %v46, 4294901760
    %61 = vmatpush1.msra.mxu0 %v60
    %v62 = vand.u32 %v51, 4294901760
    %63 = vmatprep.subr.mxu0 %v62
    %v64 = vand.u32 %v50, 4294901760
    %65 = vmatpush1.msra.mxu0 %v64
    %66 = vmatprep.subr.mxu0 0.0
    %67 = vmatpush1.msra.mxu0 0.0
    %68 = vmatprep.subr.mxu0 0.0
    %69 = vmatpush1.msra.mxu0 0.0
    %70 = vmatprep.subr.mxu0 0.0
    %71 = vmatpush1.msra.mxu0 0.0
    %72 = vmatprep.subr.mxu0 0.0
    %73 = vmatpush1.msra.mxu0 0.0
    %74 = vmatprep.subr.mxu0 0.0
    %75 = vmatpush1.msra.mxu0 0.0
    %76 = vmatprep.subr.mxu0 0.0
    %77 = vmatpush1.msra.mxu0 0.0
    %78 = vmatprep.subr.mxu0 0.0
    %79 = vmatpush1.msra.mxu0 0.0
    %80 = vmatprep.subr.mxu0 0.0
    %81 = vmatpush1.msra.mxu0 0.0
    %82 = vmatprep.subr.mxu0 0.0
    %83 = vmatpush1.msra.mxu0 0.0
    %84 = vmatprep.subr.mxu0 0.0
    %85 = vmatpush1.msra.mxu0 0.0
    %86 = vmatprep.subr.mxu0 0.0
    %87 = vmatpush1.msra.mxu0 0.0
    %88 = vmatprep.subr.mxu0 0.0
    %89 = vmatpush1.msra.mxu0 0.0
    %90 = vmatprep.subr.mxu0 0.0
    %91 = vmatpush1.msra.mxu0 0.0
    %92 = vmatprep.subr.mxu0 0.0
    %93 = vmatpush1.msra.mxu0 0.0
    %94 = vmatprep.subr.mxu0 0.0
    %95 = vmatpush1.msra.mxu0 0.0
    %96 = vmatprep.subr.mxu0 0.0
    %97 = vmatpush1.msra.mxu0 0.0
    %98 = vmatprep.subr.mxu0 0.0
    %99 = vmatpush1.msra.mxu0 0.0
    %100 = vmatprep.subr.mxu0 0.0
    %101 = vmatpush1.msra.mxu0 0.0
    %102 = vmatprep.subr.mxu0 0.0
    %103 = vmatpush1.msra.mxu0 0.0
    %104 = vmatprep.subr.mxu0 0.0
    %105 = vmatpush1.msra.mxu0 0.0
    %106 = vmatprep.subr.mxu0 0.0
    %107 = vmatpush1.msra.mxu0 0.0
    %108 = vmatprep.subr.mxu0 0.0
    %109 = vmatpush1.msra.mxu0 0.0
    %110 = vmatprep.subr.mxu0 0.0
    %111 = vmatpush1.msra.mxu0 0.0
    %112 = vmatprep.subr.mxu0 0.0
    %113 = vmatpush1.msra.mxu0 0.0
    %114 = vmatprep.subr.mxu0 0.0
    %115 = vmatpush1.msra.mxu0 0.0
    %116 = vmatprep.subr.mxu0 0.0
    %117 = vmatpush1.msra.mxu0 0.0
    %118 = vmatprep.subr.mxu0 0.0
    %119 = vmatpush1.msra.mxu0 0.0
    %120 = vmatprep.subr.mxu0 0.0
    %121 = vmatpush1.msra.mxu0 0.0
    %122 = vmatprep.subr.mxu0 0.0
    %123 = vmatpush1.msra.mxu0 0.0
    %124 = vmatprep.subr.mxu0 0.0
    %125 = vmatpush1.msra.mxu0 0.0
    %126 = vmatprep.mubr.f32.mxu0 0.0
    %v127 = vand.u32 %v56, 4294901760
    %v128 = vsub.f32 %v56, %v127
    %v129 = vand.u32 %v128, 4294901760
    %v130 = vsub.f32 %v128, %v129
    %v131 = vand.u32 %v130, 4294901760
    %132 = vmatmul.mubr.f32.gmra.mrb[0].mxu0 %v131
    %v133 = vpop.f32.mrb[0].mxu0
    %v134 = vadd.f32 0.0, %v133
    %v135 = vpop.f32.mrb[0].mxu0
    %v136 = vadd.f32 0.0, %v135
    %137 = vdwg.mxu0
    %v138 = vand.u32 %v47, 4294901760
    %v139 = vsub.f32 %v47, %v138
    %v140 = vand.u32 %v139, 4294901760
    %v141 = vsub.f32 %v139, %v140
    %v142 = vand.u32 %v141, 4294901760
    %143 = vmatprep.subr.mxu0 %v142
    %v144 = vand.u32 %v46, 4294901760
    %v145 = vsub.f32 %v46, %v144
    %v146 = vand.u32 %v145, 4294901760
    %v147 = vsub.f32 %v145, %v146
    %v148 = vand.u32 %v147, 4294901760
    %149 = vmatpush1.msra.mxu0 %v148
    %v150 = vand.u32 %v51, 4294901760
    %v151 = vsub.f32 %v51, %v150
    %v152 = vand.u32 %v151, 4294901760
    %v153 = vsub.f32 %v151, %v152
    %v154 = vand.u32 %v153, 4294901760
    %155 = vmatprep.subr.mxu0 %v154
    %v156 = vand.u32 %v50, 4294901760
    %v157 = vsub.f32 %v50, %v156
    %v158 = vand.u32 %v157, 4294901760
    %v159 = vsub.f32 %v157, %v158
    %v160 = vand.u32 %v159, 4294901760
    %161 = vmatpush1.msra.mxu0 %v160
    %162 = vmatprep.subr.mxu0 0.0
    %163 = vmatpush1.msra.mxu0 0.0
    %164 = vmatprep.subr.mxu0 0.0
    %165 = vmatpush1.msra.mxu0 0.0
    %166 = vmatprep.subr.mxu0 0.0
    %167 = vmatpush1.msra.mxu0 0.0
    %168 = vmatprep.subr.mxu0 0.0
    %169 = vmatpush1.msra.mxu0 0.0
    %170 = vmatprep.subr.mxu0 0.0
    %171 = vmatpush1.msra.mxu0 0.0
    %172 = vmatprep.subr.mxu0 0.0
    %173 = vmatpush1.msra.mxu0 0.0
    %174 = vmatprep.subr.mxu0 0.0
    %175 = vmatpush1.msra.mxu0 0.0
    %176 = vmatprep.subr.mxu0 0.0
    %177 = vmatpush1.msra.mxu0 0.0
    %178 = vmatprep.subr.mxu0 0.0
    %179 = vmatpush1.msra.mxu0 0.0
    %180 = vmatprep.subr.mxu0 0.0
    %181 = vmatpush1.msra.mxu0 0.0
    %182 = vmatprep.subr.mxu0 0.0
    %183 = vmatpush1.msra.mxu0 0.0
    %184 = vmatprep.subr.mxu0 0.0
    %185 = vmatpush1.msra.mxu0 0.0
    %186 = vmatprep.subr.mxu0 0.0
    %187 = vmatpush1.msra.mxu0 0.0
    %188 = vmatprep.subr.mxu0 0.0
    %189 = vmatpush1.msra.mxu0 0.0
    %190 = vmatprep.subr.mxu0 0.0
    %191 = vmatpush1.msra.mxu0 0.0
    %192 = vmatprep.subr.mxu0 0.0
    %193 = vmatpush1.msra.mxu0 0.0
    %194 = vmatprep.subr.mxu0 0.0
    %195 = vmatpush1.msra.mxu0 0.0
    %196 = vmatprep.subr.mxu0 0.0
    %197 = vmatpush1.msra.mxu0 0.0
    %198 = vmatprep.subr.mxu0 0.0
    %199 = vmatpush1.msra.mxu0 0.0
    %200 = vmatprep.subr.mxu0 0.0
    %201 = vmatpush1.msra.mxu0 0.0
    %202 = vmatprep.subr.mxu0 0.0
    %203 = vmatpush1.msra.mxu0 0.0
    %204 = vmatprep.subr.mxu0 0.0
    %205 = vmatpush1.msra.mxu0 0.0
    %206 = vmatprep.subr.mxu0 0.0
    %207 = vmatpush1.msra.mxu0 0.0
    %208 = vmatprep.subr.mxu0 0.0
    %209 = vmatpush1.msra.mxu0 0.0
    %210 = vmatprep.subr.mxu0 0.0
    %211 = vmatpush1.msra.mxu0 0.0
    %212 = vmatprep.subr.mxu0 0.0
    %213 = vmatpush1.msra.mxu0 0.0
    %214 = vmatprep.subr.mxu0 0.0
    %215 = vmatpush1.msra.mxu0 0.0
    %216 = vmatprep.subr.mxu0 0.0
    %217 = vmatpush1.msra.mxu0 0.0
    %218 = vmatprep.subr.mxu0 0.0
    %219 = vmatpush1.msra.mxu0 0.0
    %220 = vmatprep.subr.mxu0 0.0
    %221 = vmatpush1.msra.mxu0 0.0
    %222 = vmatprep.mubr.f32.mxu0 0.0
    %v223 = vand.u32 %v56, 4294901760
    %224 = vmatmul.mubr.f32.gmra.mrb[0].mxu0 %v223
    %v225 = vpop.f32.mrb[0].mxu0
    %v226 = vadd.f32 %v134, %v225
    %v227 = vpop.f32.mrb[0].mxu0
    %v228 = vadd.f32 %v136, %v227
    %229 = vdwg.mxu0
    %v230 = vand.u32 %v47, 4294901760
    %v231 = vsub.f32 %v47, %v230
    %232 = vmatprep.subr.mxu0 %v231
    %v233 = vand.u32 %v46, 4294901760
    %v234 = vsub.f32 %v46, %v233
    %235 = vmatpush1.msra.mxu0 %v234
    %v236 = vand.u32 %v51, 4294901760
    %v237 = vsub.f32 %v51, %v236
    %238 = vmatprep.subr.mxu0 %v237
    %v239 = vand.u32 %v50, 4294901760
    %v240 = vsub.f32 %v50, %v239
    %241 = vmatpush1.msra.mxu0 %v240
    %242 = vmatprep.subr.mxu0 0.0
    %243 = vmatpush1.msra.mxu0 0.0
    %244 = vmatprep.subr.mxu0 0.0
    %245 = vmatpush1.msra.mxu0 0.0
    %246 = vmatprep.subr.mxu0 0.0
    %247 = vmatpush1.msra.mxu0 0.0
    %248 = vmatprep.subr.mxu0 0.0
    %249 = vmatpush1.msra.mxu0 0.0
    %250 = vmatprep.subr.mxu0 0.0
    %251 = vmatpush1.msra.mxu0 0.0
    %252 = vmatprep.subr.mxu0 0.0
    %253 = vmatpush1.msra.mxu0 0.0
    %254 = vmatprep.subr.mxu0 0.0
    %255 = vmatpush1.msra.mxu0 0.0
    %256 = vmatprep.subr.mxu0 0.0
    %257 = vmatpush1.msra.mxu0 0.0
    %258 = vmatprep.subr.mxu0 0.0
    %259 = vmatpush1.msra.mxu0 0.0
    %260 = vmatprep.subr.mxu0 0.0
    %261 = vmatpush1.msra.mxu0 0.0
    %262 = vmatprep.subr.mxu0 0.0
    %263 = vmatpush1.msra.mxu0 0.0
    %264 = vmatprep.subr.mxu0 0.0
    %265 = vmatpush1.msra.mxu0 0.0
    %266 = vmatprep.subr.mxu0 0.0
    %267 = vmatpush1.msra.mxu0 0.0
    %268 = vmatprep.subr.mxu0 0.0
    %269 = vmatpush1.msra.mxu0 0.0
    %270 = vmatprep.subr.mxu0 0.0
    %271 = vmatpush1.msra.mxu0 0.0
    %272 = vmatprep.subr.mxu0 0.0
    %273 = vmatpush1.msra.mxu0 0.0
    %274 = vmatprep.subr.mxu0 0.0
    %275 = vmatpush1.msra.mxu0 0.0
    %276 = vmatprep.subr.mxu0 0.0
    %277 = vmatpush1.msra.mxu0 0.0
    %278 = vmatprep.subr.mxu0 0.0
    %279 = vmatpush1.msra.mxu0 0.0
    %280 = vmatprep.subr.mxu0 0.0
    %281 = vmatpush1.msra.mxu0 0.0
    %282 = vmatprep.subr.mxu0 0.0
    %283 = vmatpush1.msra.mxu0 0.0
    %284 = vmatprep.subr.mxu0 0.0
    %285 = vmatpush1.msra.mxu0 0.0
    %286 = vmatprep.subr.mxu0 0.0
    %287 = vmatpush1.msra.mxu0 0.0
    %288 = vmatprep.subr.mxu0 0.0
    %289 = vmatpush1.msra.mxu0 0.0
    %290 = vmatprep.subr.mxu0 0.0
    %291 = vmatpush1.msra.mxu0 0.0
    %292 = vmatprep.subr.mxu0 0.0
    %293 = vmatpush1.msra.mxu0 0.0
    %294 = vmatprep.subr.mxu0 0.0
    %295 = vmatpush1.msra.mxu0 0.0
    %296 = vmatprep.subr.mxu0 0.0
    %297 = vmatpush1.msra.mxu0 0.0
    %298 = vmatprep.subr.mxu0 0.0
    %299 = vmatpush1.msra.mxu0 0.0
    %300 = vmatprep.subr.mxu0 0.0
    %301 = vmatpush1.msra.mxu0 0.0
    %302 = vmatprep.mubr.f32.mxu0 0.0
    %v303 = vand.u32 %v56, 4294901760
    %v304 = vsub.f32 %v56, %v303
    %305 = vmatmul.mubr.f32.gmra.mrb[0].mxu0 %v304
    %v306 = vpop.f32.mrb[0].mxu0
    %v307 = vadd.f32 %v226, %v306
    %v308 = vpop.f32.mrb[0].mxu0
    %v309 = vadd.f32 %v228, %v308
    %310 = vdwg.mxu0
    %v311 = vand.u32 %v47, 4294901760
    %312 = vmatprep.subr.mxu0 %v311
    %v313 = vand.u32 %v46, 4294901760
    %314 = vmatpush1.msra.mxu0 %v313
    %v315 = vand.u32 %v51, 4294901760
    %316 = vmatprep.subr.mxu0 %v315
    %v317 = vand.u32 %v50, 4294901760
    %318 = vmatpush1.msra.mxu0 %v317
    %319 = vmatprep.subr.mxu0 0.0
    %320 = vmatpush1.msra.mxu0 0.0
    %321 = vmatprep.subr.mxu0 0.0
    %322 = vmatpush1.msra.mxu0 0.0
    %323 = vmatprep.subr.mxu0 0.0
    %324 = vmatpush1.msra.mxu0 0.0
    %325 = vmatprep.subr.mxu0 0.0
    %326 = vmatpush1.msra.mxu0 0.0
    %327 = vmatprep.subr.mxu0 0.0
    %328 = vmatpush1.msra.mxu0 0.0
    %329 = vmatprep.subr.mxu0 0.0
    %330 = vmatpush1.msra.mxu0 0.0
    %331 = vmatprep.subr.mxu0 0.0
    %332 = vmatpush1.msra.mxu0 0.0
    %333 = vmatprep.subr.mxu0 0.0
    %334 = vmatpush1.msra.mxu0 0.0
    %335 = vmatprep.subr.mxu0 0.0
    %336 = vmatpush1.msra.mxu0 0.0
    %337 = vmatprep.subr.mxu0 0.0
    %338 = vmatpush1.msra.mxu0 0.0
    %339 = vmatprep.subr.mxu0 0.0
    %340 = vmatpush1.msra.mxu0 0.0
    %341 = vmatprep.subr.mxu0 0.0
    %342 = vmatpush1.msra.mxu0 0.0
    %343 = vmatprep.subr.mxu0 0.0
    %344 = vmatpush1.msra.mxu0 0.0
    %345 = vmatprep.subr.mxu0 0.0
    %346 = vmatpush1.msra.mxu0 0.0
    %347 = vmatprep.subr.mxu0 0.0
    %348 = vmatpush1.msra.mxu0 0.0
    %349 = vmatprep.subr.mxu0 0.0
    %350 = vmatpush1.msra.mxu0 0.0
    %351 = vmatprep.subr.mxu0 0.0
    %352 = vmatpush1.msra.mxu0 0.0
    %353 = vmatprep.subr.mxu0 0.0
    %354 = vmatpush1.msra.mxu0 0.0
    %355 = vmatprep.subr.mxu0 0.0
    %356 = vmatpush1.msra.mxu0 0.0
    %357 = vmatprep.subr.mxu0 0.0
    %358 = vmatpush1.msra.mxu0 0.0
    %359 = vmatprep.subr.mxu0 0.0
    %360 = vmatpush1.msra.mxu0 0.0
    %361 = vmatprep.subr.mxu0 0.0
    %362 = vmatpush1.msra.mxu0 0.0
    %363 = vmatprep.subr.mxu0 0.0
    %364 = vmatpush1.msra.mxu0 0.0
    %365 = vmatprep.subr.mxu0 0.0
    %366 = vmatpush1.msra.mxu0 0.0
    %367 = vmatprep.subr.mxu0 0.0
    %368 = vmatpush1.msra.mxu0 0.0
    %369 = vmatprep.subr.mxu0 0.0
    %370 = vmatpush1.msra.mxu0 0.0
    %371 = vmatprep.subr.mxu0 0.0
    %372 = vmatpush1.msra.mxu0 0.0
    %373 = vmatprep.subr.mxu0 0.0
    %374 = vmatpush1.msra.mxu0 0.0
    %375 = vmatprep.subr.mxu0 0.0
    %376 = vmatpush1.msra.mxu0 0.0
    %377 = vmatprep.subr.mxu0 0.0
    %378 = vmatpush1.msra.mxu0 0.0
    %379 = vmatprep.mubr.f32.mxu0 0.0
    %v380 = vand.u32 %v56, 4294901760
    %v381 = vsub.f32 %v56, %v380
    %v382 = vand.u32 %v381, 4294901760
    %383 = vmatmul.mubr.f32.gmra.mrb[0].mxu0 %v382
    %v384 = vpop.f32.mrb[0].mxu0
    %v385 = vadd.f32 %v307, %v384
    %v386 = vpop.f32.mrb[0].mxu0
    %v387 = vadd.f32 %v309, %v386
    %388 = vdwg.mxu0
    %v389 = vand.u32 %v47, 4294901760
    %v390 = vsub.f32 %v47, %v389
    %v391 = vand.u32 %v390, 4294901760
    %392 = vmatprep.subr.mxu0 %v391
    %v393 = vand.u32 %v46, 4294901760
    %v394 = vsub.f32 %v46, %v393
    %v395 = vand.u32 %v394, 4294901760
    %396 = vmatpush1.msra.mxu0 %v395
    %v397 = vand.u32 %v51, 4294901760
    %v398 = vsub.f32 %v51, %v397
    %v399 = vand.u32 %v398, 4294901760
    %400 = vmatprep.subr.mxu0 %v399
    %v401 = vand.u32 %v50, 4294901760
    %v402 = vsub.f32 %v50, %v401
    %v403 = vand.u32 %v402, 4294901760
    %404 = vmatpush1.msra.mxu0 %v403
    %405 = vmatprep.subr.mxu0 0.0
    %406 = vmatpush1.msra.mxu0 0.0
    %407 = vmatprep.subr.mxu0 0.0
    %408 = vmatpush1.msra.mxu0 0.0
    %409 = vmatprep.subr.mxu0 0.0
    %410 = vmatpush1.msra.mxu0 0.0
    %411 = vmatprep.subr.mxu0 0.0
    %412 = vmatpush1.msra.mxu0 0.0
    %413 = vmatprep.subr.mxu0 0.0
    %414 = vmatpush1.msra.mxu0 0.0
    %415 = vmatprep.subr.mxu0 0.0
    %416 = vmatpush1.msra.mxu0 0.0
    %417 = vmatprep.subr.mxu0 0.0
    %418 = vmatpush1.msra.mxu0 0.0
    %419 = vmatprep.subr.mxu0 0.0
    %420 = vmatpush1.msra.mxu0 0.0
    %421 = vmatprep.subr.mxu0 0.0
    %422 = vmatpush1.msra.mxu0 0.0
    %423 = vmatprep.subr.mxu0 0.0
    %424 = vmatpush1.msra.mxu0 0.0
    %425 = vmatprep.subr.mxu0 0.0
    %426 = vmatpush1.msra.mxu0 0.0
    %427 = vmatprep.subr.mxu0 0.0
    %428 = vmatpush1.msra.mxu0 0.0
    %429 = vmatprep.subr.mxu0 0.0
    %430 = vmatpush1.msra.mxu0 0.0
    %431 = vmatprep.subr.mxu0 0.0
    %432 = vmatpush1.msra.mxu0 0.0
    %433 = vmatprep.subr.mxu0 0.0
    %434 = vmatpush1.msra.mxu0 0.0
    %435 = vmatprep.subr.mxu0 0.0
    %436 = vmatpush1.msra.mxu0 0.0
    %437 = vmatprep.subr.mxu0 0.0
    %438 = vmatpush1.msra.mxu0 0.0
    %439 = vmatprep.subr.mxu0 0.0
    %440 = vmatpush1.msra.mxu0 0.0
    %441 = vmatprep.subr.mxu0 0.0
    %442 = vmatpush1.msra.mxu0 0.0
    %443 = vmatprep.subr.mxu0 0.0
    %444 = vmatpush1.msra.mxu0 0.0
    %445 = vmatprep.subr.mxu0 0.0
    %446 = vmatpush1.msra.mxu0 0.0
    %447 = vmatprep.subr.mxu0 0.0
    %448 = vmatpush1.msra.mxu0 0.0
    %449 = vmatprep.subr.mxu0 0.0
    %450 = vmatpush1.msra.mxu0 0.0
    %451 = vmatprep.subr.mxu0 0.0
    %452 = vmatpush1.msra.mxu0 0.0
    %453 = vmatprep.subr.mxu0 0.0
    %454 = vmatpush1.msra.mxu0 0.0
    %455 = vmatprep.subr.mxu0 0.0
    %456 = vmatpush1.msra.mxu0 0.0
    %457 = vmatprep.subr.mxu0 0.0
    %458 = vmatpush1.msra.mxu0 0.0
    %459 = vmatprep.subr.mxu0 0.0
    %460 = vmatpush1.msra.mxu0 0.0
    %461 = vmatprep.subr.mxu0 0.0
    %462 = vmatpush1.msra.mxu0 0.0
    %463 = vmatprep.subr.mxu0 0.0
    %464 = vmatpush1.msra.mxu0 0.0
    %465 = vmatprep.mubr.f32.mxu0 0.0
    %v466 = vand.u32 %v56, 4294901760
    %467 = vmatmul.mubr.f32.gmra.mrb[0].mxu0 %v466
    %v468 = vpop.f32.mrb[0].mxu0
    %v469 = vadd.f32 %v385, %v468
    %v470 = vpop.f32.mrb[0].mxu0
    %v471 = vadd.f32 %v387, %v470
    %472 = vdwg.mxu0
    %v473 = vand.u32 %v47, 4294901760
    %474 = vmatprep.subr.mxu0 %v473
    %v475 = vand.u32 %v46, 4294901760
    %476 = vmatpush1.msra.mxu0 %v475
    %v477 = vand.u32 %v51, 4294901760
    %478 = vmatprep.subr.mxu0 %v477
    %v479 = vand.u32 %v50, 4294901760
    %480 = vmatpush1.msra.mxu0 %v479
    %481 = vmatprep.subr.mxu0 0.0
    %482 = vmatpush1.msra.mxu0 0.0
    %483 = vmatprep.subr.mxu0 0.0
    %484 = vmatpush1.msra.mxu0 0.0
    %485 = vmatprep.subr.mxu0 0.0
    %486 = vmatpush1.msra.mxu0 0.0
    %487 = vmatprep.subr.mxu0 0.0
    %488 = vmatpush1.msra.mxu0 0.0
    %489 = vmatprep.subr.mxu0 0.0
    %490 = vmatpush1.msra.mxu0 0.0
    %491 = vmatprep.subr.mxu0 0.0
    %492 = vmatpush1.msra.mxu0 0.0
    %493 = vmatprep.subr.mxu0 0.0
    %494 = vmatpush1.msra.mxu0 0.0
    %495 = vmatprep.subr.mxu0 0.0
    %496 = vmatpush1.msra.mxu0 0.0
    %497 = vmatprep.subr.mxu0 0.0
    %498 = vmatpush1.msra.mxu0 0.0
    %499 = vmatprep.subr.mxu0 0.0
    %500 = vmatpush1.msra.mxu0 0.0
    %501 = vmatprep.subr.mxu0 0.0
    %502 = vmatpush1.msra.mxu0 0.0
    %503 = vmatprep.subr.mxu0 0.0
    %504 = vmatpush1.msra.mxu0 0.0
    %505 = vmatprep.subr.mxu0 0.0
    %506 = vmatpush1.msra.mxu0 0.0
    %507 = vmatprep.subr.mxu0 0.0
    %508 = vmatpush1.msra.mxu0 0.0
    %509 = vmatprep.subr.mxu0 0.0
    %510 = vmatpush1.msra.mxu0 0.0
    %511 = vmatprep.subr.mxu0 0.0
    %512 = vmatpush1.msra.mxu0 0.0
    %513 = vmatprep.subr.mxu0 0.0
    %514 = vmatpush1.msra.mxu0 0.0
    %515 = vmatprep.subr.mxu0 0.0
    %516 = vmatpush1.msra.mxu0 0.0
    %517 = vmatprep.subr.mxu0 0.0
    %518 = vmatpush1.msra.mxu0 0.0
    %519 = vmatprep.subr.mxu0 0.0
    %520 = vmatpush1.msra.mxu0 0.0
    %521 = vmatprep.subr.mxu0 0.0
    %522 = vmatpush1.msra.mxu0 0.0
    %523 = vmatprep.subr.mxu0 0.0
    %524 = vmatpush1.msra.mxu0 0.0
    %525 = vmatprep.subr.mxu0 0.0
    %526 = vmatpush1.msra.mxu0 0.0
    %527 = vmatprep.subr.mxu0 0.0
    %528 = vmatpush1.msra.mxu0 0.0
    %529 = vmatprep.subr.mxu0 0.0
    %530 = vmatpush1.msra.mxu0 0.0
    %531 = vmatprep.subr.mxu0 0.0
    %532 = vmatpush1.msra.mxu0 0.0
    %533 = vmatprep.subr.mxu0 0.0
    %534 = vmatpush1.msra.mxu0 0.0
    %535 = vmatprep.subr.mxu0 0.0
    %536 = vmatpush1.msra.mxu0 0.0
    %537 = vmatprep.subr.mxu0 0.0
    %538 = vmatpush1.msra.mxu0 0.0
    %539 = vmatprep.subr.mxu0 0.0
    %540 = vmatpush1.msra.mxu0 0.0
    %541 = vmatprep.mubr.f32.mxu0 0.0
    %v542 = vand.u32 %v56, 4294901760
    %543 = vmatmul.mubr.f32.gmra.mrb[0].mxu0 %v542
    %v544 = vpop.f32.mrb[0].mxu0
    %v545 = vadd.f32 %v469, %v544
    %v546 = vpop.f32.mrb[0].mxu0
    %v547 = vadd.f32 %v471, %v546
    %548 = vdwg.mxu0
    %v549 = vand.u32 %v49, 4294901760
    %550 = vmatprep.subr.mxu0 %v549
    %v551 = vand.u32 %v48, 4294901760
    %552 = vmatpush1.msra.mxu0 %v551
    %v553 = vand.u32 %v53, 4294901760
    %554 = vmatprep.subr.mxu0 %v553
    %v555 = vand.u32 %v52, 4294901760
    %556 = vmatpush1.msra.mxu0 %v555
    %557 = vmatprep.subr.mxu0 0.0
    %558 = vmatpush1.msra.mxu0 0.0
    %559 = vmatprep.subr.mxu0 0.0
    %560 = vmatpush1.msra.mxu0 0.0
    %561 = vmatprep.subr.mxu0 0.0
    %562 = vmatpush1.msra.mxu0 0.0
    %563 = vmatprep.subr.mxu0 0.0
    %564 = vmatpush1.msra.mxu0 0.0
    %565 = vmatprep.subr.mxu0 0.0
    %566 = vmatpush1.msra.mxu0 0.0
    %567 = vmatprep.subr.mxu0 0.0
    %568 = vmatpush1.msra.mxu0 0.0
    %569 = vmatprep.subr.mxu0 0.0
    %570 = vmatpush1.msra.mxu0 0.0
    %571 = vmatprep.subr.mxu0 0.0
    %572 = vmatpush1.msra.mxu0 0.0
    %573 = vmatprep.subr.mxu0 0.0
    %574 = vmatpush1.msra.mxu0 0.0
    %575 = vmatprep.subr.mxu0 0.0
    %576 = vmatpush1.msra.mxu0 0.0
    %577 = vmatprep.subr.mxu0 0.0
    %578 = vmatpush1.msra.mxu0 0.0
    %579 = vmatprep.subr.mxu0 0.0
    %580 = vmatpush1.msra.mxu0 0.0
    %581 = vmatprep.subr.mxu0 0.0
    %582 = vmatpush1.msra.mxu0 0.0
    %583 = vmatprep.subr.mxu0 0.0
    %584 = vmatpush1.msra.mxu0 0.0
    %585 = vmatprep.subr.mxu0 0.0
    %586 = vmatpush1.msra.mxu0 0.0
    %587 = vmatprep.subr.mxu0 0.0
    %588 = vmatpush1.msra.mxu0 0.0
    %589 = vmatprep.subr.mxu0 0.0
    %590 = vmatpush1.msra.mxu0 0.0
    %591 = vmatprep.subr.mxu0 0.0
    %592 = vmatpush1.msra.mxu0 0.0
    %593 = vmatprep.subr.mxu0 0.0
    %594 = vmatpush1.msra.mxu0 0.0
    %595 = vmatprep.subr.mxu0 0.0
    %596 = vmatpush1.msra.mxu0 0.0
    %597 = vmatprep.subr.mxu0 0.0
    %598 = vmatpush1.msra.mxu0 0.0
    %599 = vmatprep.subr.mxu0 0.0
    %600 = vmatpush1.msra.mxu0 0.0
    %601 = vmatprep.subr.mxu0 0.0
    %602 = vmatpush1.msra.mxu0 0.0
    %603 = vmatprep.subr.mxu0 0.0
    %604 = vmatpush1.msra.mxu0 0.0
    %605 = vmatprep.subr.mxu0 0.0
    %606 = vmatpush1.msra.mxu0 0.0
    %607 = vmatprep.subr.mxu0 0.0
    %608 = vmatpush1.msra.mxu0 0.0
    %609 = vmatprep.subr.mxu0 0.0
    %610 = vmatpush1.msra.mxu0 0.0
    %611 = vmatprep.subr.mxu0 0.0
    %612 = vmatpush1.msra.mxu0 0.0
    %613 = vmatprep.subr.mxu0 0.0
    %614 = vmatpush1.msra.mxu0 0.0
    %615 = vmatprep.subr.mxu0 0.0
    %616 = vmatpush1.msra.mxu0 0.0
    %617 = vmatprep.mubr.f32.mxu0 0.0
    %v618 = vand.u32 %v56, 4294901760
    %v619 = vsub.f32 %v56, %v618
    %v620 = vand.u32 %v619, 4294901760
    %v621 = vsub.f32 %v619, %v620
    %v622 = vand.u32 %v621, 4294901760
    %623 = vmatmul.mubr.f32.gmra.mrb[0].mxu0 %v622
    %v624 = vpop.f32.mrb[0].mxu0
    %v625 = vadd.f32 0.0, %v624
    %v626 = vpop.f32.mrb[0].mxu0
    %v627 = vadd.f32 0.0, %v626
    %628 = vdwg.mxu0
    %v629 = vand.u32 %v49, 4294901760
    %v630 = vsub.f32 %v49, %v629
    %v631 = vand.u32 %v630, 4294901760
    %v632 = vsub.f32 %v630, %v631
    %v633 = vand.u32 %v632, 4294901760
    %634 = vmatprep.subr.mxu0 %v633
    %v635 = vand.u32 %v48, 4294901760
    %v636 = vsub.f32 %v48, %v635
    %v637 = vand.u32 %v636, 4294901760
    %v638 = vsub.f32 %v636, %v637
    %v639 = vand.u32 %v638, 4294901760
    %640 = vmatpush1.msra.mxu0 %v639
    %v641 = vand.u32 %v53, 4294901760
    %v642 = vsub.f32 %v53, %v641
    %v643 = vand.u32 %v642, 4294901760
    %v644 = vsub.f32 %v642, %v643
    %v645 = vand.u32 %v644, 4294901760
    %646 = vmatprep.subr.mxu0 %v645
    %v647 = vand.u32 %v52, 4294901760
    %v648 = vsub.f32 %v52, %v647
    %v649 = vand.u32 %v648, 4294901760
    %v650 = vsub.f32 %v648, %v649
    %v651 = vand.u32 %v650, 4294901760
    %652 = vmatpush1.msra.mxu0 %v651
    %653 = vmatprep.subr.mxu0 0.0
    %654 = vmatpush1.msra.mxu0 0.0
    %655 = vmatprep.subr.mxu0 0.0
    %656 = vmatpush1.msra.mxu0 0.0
    %657 = vmatprep.subr.mxu0 0.0
    %658 = vmatpush1.msra.mxu0 0.0
    %659 = vmatprep.subr.mxu0 0.0
    %660 = vmatpush1.msra.mxu0 0.0
    %661 = vmatprep.subr.mxu0 0.0
    %662 = vmatpush1.msra.mxu0 0.0
    %663 = vmatprep.subr.mxu0 0.0
    %664 = vmatpush1.msra.mxu0 0.0
    %665 = vmatprep.subr.mxu0 0.0
    %666 = vmatpush1.msra.mxu0 0.0
    %667 = vmatprep.subr.mxu0 0.0
    %668 = vmatpush1.msra.mxu0 0.0
    %669 = vmatprep.subr.mxu0 0.0
    %670 = vmatpush1.msra.mxu0 0.0
    %671 = vmatprep.subr.mxu0 0.0
    %672 = vmatpush1.msra.mxu0 0.0
    %673 = vmatprep.subr.mxu0 0.0
    %674 = vmatpush1.msra.mxu0 0.0
    %675 = vmatprep.subr.mxu0 0.0
    %676 = vmatpush1.msra.mxu0 0.0
    %677 = vmatprep.subr.mxu0 0.0
    %678 = vmatpush1.msra.mxu0 0.0
    %679 = vmatprep.subr.mxu0 0.0
    %680 = vmatpush1.msra.mxu0 0.0
    %681 = vmatprep.subr.mxu0 0.0
    %682 = vmatpush1.msra.mxu0 0.0
    %683 = vmatprep.subr.mxu0 0.0
    %684 = vmatpush1.msra.mxu0 0.0
    %685 = vmatprep.subr.mxu0 0.0
    %686 = vmatpush1.msra.mxu0 0.0
    %687 = vmatprep.subr.mxu0 0.0
    %688 = vmatpush1.msra.mxu0 0.0
    %689 = vmatprep.subr.mxu0 0.0
    %690 = vmatpush1.msra.mxu0 0.0
    %691 = vmatprep.subr.mxu0 0.0
    %692 = vmatpush1.msra.mxu0 0.0
    %693 = vmatprep.subr.mxu0 0.0
    %694 = vmatpush1.msra.mxu0 0.0
    %695 = vmatprep.subr.mxu0 0.0
    %696 = vmatpush1.msra.mxu0 0.0
    %697 = vmatprep.subr.mxu0 0.0
    %698 = vmatpush1.msra.mxu0 0.0
    %699 = vmatprep.subr.mxu0 0.0
    %700 = vmatpush1.msra.mxu0 0.0
    %701 = vmatprep.subr.mxu0 0.0
    %702 = vmatpush1.msra.mxu0 0.0
    %703 = vmatprep.subr.mxu0 0.0
    %704 = vmatpush1.msra.mxu0 0.0
    %705 = vmatprep.subr.mxu0 0.0
    %706 = vmatpush1.msra.mxu0 0.0
    %707 = vmatprep.subr.mxu0 0.0
    %708 = vmatpush1.msra.mxu0 0.0
    %709 = vmatprep.subr.mxu0 0.0
    %710 = vmatpush1.msra.mxu0 0.0
    %711 = vmatprep.subr.mxu0 0.0
    %712 = vmatpush1.msra.mxu0 0.0
    %713 = vmatprep.mubr.f32.mxu0 0.0
    %v714 = vand.u32 %v56, 4294901760
    %715 = vmatmul.mubr.f32.gmra.mrb[0].mxu0 %v714
    %v716 = vpop.f32.mrb[0].mxu0
    %v717 = vadd.f32 %v625, %v716
    %v718 = vpop.f32.mrb[0].mxu0
    %v719 = vadd.f32 %v627, %v718
    %720 = vdwg.mxu0
    %v721 = vand.u32 %v49, 4294901760
    %v722 = vsub.f32 %v49, %v721
    %723 = vmatprep.subr.mxu0 %v722
    %v724 = vand.u32 %v48, 4294901760
    %v725 = vsub.f32 %v48, %v724
    %726 = vmatpush1.msra.mxu0 %v725
    %v727 = vand.u32 %v53, 4294901760
    %v728 = vsub.f32 %v53, %v727
    %729 = vmatprep.subr.mxu0 %v728
    %v730 = vand.u32 %v52, 4294901760
    %v731 = vsub.f32 %v52, %v730
    %732 = vmatpush1.msra.mxu0 %v731
    %733 = vmatprep.subr.mxu0 0.0
    %734 = vmatpush1.msra.mxu0 0.0
    %735 = vmatprep.subr.mxu0 0.0
    %736 = vmatpush1.msra.mxu0 0.0
    %737 = vmatprep.subr.mxu0 0.0
    %738 = vmatpush1.msra.mxu0 0.0
    %739 = vmatprep.subr.mxu0 0.0
    %740 = vmatpush1.msra.mxu0 0.0
    %741 = vmatprep.subr.mxu0 0.0
    %742 = vmatpush1.msra.mxu0 0.0
    %743 = vmatprep.subr.mxu0 0.0
    %744 = vmatpush1.msra.mxu0 0.0
    %745 = vmatprep.subr.mxu0 0.0
    %746 = vmatpush1.msra.mxu0 0.0
    %747 = vmatprep.subr.mxu0 0.0
    %748 = vmatpush1.msra.mxu0 0.0
    %749 = vmatprep.subr.mxu0 0.0
    %750 = vmatpush1.msra.mxu0 0.0
    %751 = vmatprep.subr.mxu0 0.0
    %752 = vmatpush1.msra.mxu0 0.0
    %753 = vmatprep.subr.mxu0 0.0
    %754 = vmatpush1.msra.mxu0 0.0
    %755 = vmatprep.subr.mxu0 0.0
    %756 = vmatpush1.msra.mxu0 0.0
    %757 = vmatprep.subr.mxu0 0.0
    %758 = vmatpush1.msra.mxu0 0.0
    %759 = vmatprep.subr.mxu0 0.0
    %760 = vmatpush1.msra.mxu0 0.0
    %761 = vmatprep.subr.mxu0 0.0
    %762 = vmatpush1.msra.mxu0 0.0
    %763 = vmatprep.subr.mxu0 0.0
    %764 = vmatpush1.msra.mxu0 0.0
    %765 = vmatprep.subr.mxu0 0.0
    %766 = vmatpush1.msra.mxu0 0.0
    %767 = vmatprep.subr.mxu0 0.0
    %768 = vmatpush1.msra.mxu0 0.0
    %769 = vmatprep.subr.mxu0 0.0
    %770 = vmatpush1.msra.mxu0 0.0
    %771 = vmatprep.subr.mxu0 0.0
    %772 = vmatpush1.msra.mxu0 0.0
    %773 = vmatprep.subr.mxu0 0.0
    %774 = vmatpush1.msra.mxu0 0.0
    %775 = vmatprep.subr.mxu0 0.0
    %776 = vmatpush1.msra.mxu0 0.0
    %777 = vmatprep.subr.mxu0 0.0
    %778 = vmatpush1.msra.mxu0 0.0
    %779 = vmatprep.subr.mxu0 0.0
    %780 = vmatpush1.msra.mxu0 0.0
    %781 = vmatprep.subr.mxu0 0.0
    %782 = vmatpush1.msra.mxu0 0.0
    %783 = vmatprep.subr.mxu0 0.0
    %784 = vmatpush1.msra.mxu0 0.0
    %785 = vmatprep.subr.mxu0 0.0
    %786 = vmatpush1.msra.mxu0 0.0
    %787 = vmatprep.subr.mxu0 0.0
    %788 = vmatpush1.msra.mxu0 0.0
    %789 = vmatprep.subr.mxu0 0.0
    %790 = vmatpush1.msra.mxu0 0.0
    %791 = vmatprep.subr.mxu0 0.0
    %792 = vmatpush1.msra.mxu0 0.0
    %793 = vmatprep.mubr.f32.mxu0 0.0
    %v794 = vand.u32 %v56, 4294901760
    %v795 = vsub.f32 %v56, %v794
    %796 = vmatmul.mubr.f32.gmra.mrb[0].mxu0 %v795
    %v797 = vpop.f32.mrb[0].mxu0
    %v798 = vadd.f32 %v717, %v797
    %v799 = vpop.f32.mrb[0].mxu0
    %v800 = vadd.f32 %v719, %v799
    %801 = vdwg.mxu0
    %v802 = vand.u32 %v49, 4294901760
    %803 = vmatprep.subr.mxu0 %v802
    %v804 = vand.u32 %v48, 4294901760
    %805 = vmatpush1.msra.mxu0 %v804
    %v806 = vand.u32 %v53, 4294901760
    %807 = vmatprep.subr.mxu0 %v806
    %v808 = vand.u32 %v52, 4294901760
    %809 = vmatpush1.msra.mxu0 %v808
    %810 = vmatprep.subr.mxu0 0.0
    %811 = vmatpush1.msra.mxu0 0.0
    %812 = vmatprep.subr.mxu0 0.0
    %813 = vmatpush1.msra.mxu0 0.0
    %814 = vmatprep.subr.mxu0 0.0
    %815 = vmatpush1.msra.mxu0 0.0
    %816 = vmatprep.subr.mxu0 0.0
    %817 = vmatpush1.msra.mxu0 0.0
    %818 = vmatprep.subr.mxu0 0.0
    %819 = vmatpush1.msra.mxu0 0.0
    %820 = vmatprep.subr.mxu0 0.0
    %821 = vmatpush1.msra.mxu0 0.0
    %822 = vmatprep.subr.mxu0 0.0
    %823 = vmatpush1.msra.mxu0 0.0
    %824 = vmatprep.subr.mxu0 0.0
    %825 = vmatpush1.msra.mxu0 0.0
    %826 = vmatprep.subr.mxu0 0.0
    %827 = vmatpush1.msra.mxu0 0.0
    %828 = vmatprep.subr.mxu0 0.0
    %829 = vmatpush1.msra.mxu0 0.0
    %830 = vmatprep.subr.mxu0 0.0
    %831 = vmatpush1.msra.mxu0 0.0
    %832 = vmatprep.subr.mxu0 0.0
    %833 = vmatpush1.msra.mxu0 0.0
    %834 = vmatprep.subr.mxu0 0.0
    %835 = vmatpush1.msra.mxu0 0.0
    %836 = vmatprep.subr.mxu0 0.0
    %837 = vmatpush1.msra.mxu0 0.0
    %838 = vmatprep.subr.mxu0 0.0
    %839 = vmatpush1.msra.mxu0 0.0
    %840 = vmatprep.subr.mxu0 0.0
    %841 = vmatpush1.msra.mxu0 0.0
    %842 = vmatprep.subr.mxu0 0.0
    %843 = vmatpush1.msra.mxu0 0.0
    %844 = vmatprep.subr.mxu0 0.0
    %845 = vmatpush1.msra.mxu0 0.0
    %846 = vmatprep.subr.mxu0 0.0
    %847 = vmatpush1.msra.mxu0 0.0
    %848 = vmatprep.subr.mxu0 0.0
    %849 = vmatpush1.msra.mxu0 0.0
    %850 = vmatprep.subr.mxu0 0.0
    %851 = vmatpush1.msra.mxu0 0.0
    %852 = vmatprep.subr.mxu0 0.0
    %853 = vmatpush1.msra.mxu0 0.0
    %854 = vmatprep.subr.mxu0 0.0
    %855 = vmatpush1.msra.mxu0 0.0
    %856 = vmatprep.subr.mxu0 0.0
    %857 = vmatpush1.msra.mxu0 0.0
    %858 = vmatprep.subr.mxu0 0.0
    %859 = vmatpush1.msra.mxu0 0.0
    %860 = vmatprep.subr.mxu0 0.0
    %861 = vmatpush1.msra.mxu0 0.0
    %862 = vmatprep.subr.mxu0 0.0
    %863 = vmatpush1.msra.mxu0 0.0
    %864 = vmatprep.subr.mxu0 0.0
    %865 = vmatpush1.msra.mxu0 0.0
    %866 = vmatprep.subr.mxu0 0.0
    %867 = vmatpush1.msra.mxu0 0.0
    %868 = vmatprep.subr.mxu0 0.0
    %869 = vmatpush1.msra.mxu0 0.0
    %870 = vmatprep.mubr.f32.mxu0 0.0
    %v871 = vand.u32 %v56, 4294901760
    %v872 = vsub.f32 %v56, %v871
    %v873 = vand.u32 %v872, 4294901760
    %874 = vmatmul.mubr.f32.gmra.mrb[0].mxu0 %v873
    %v875 = vpop.f32.mrb[0].mxu0
    %v876 = vadd.f32 %v798, %v875
    %v877 = vpop.f32.mrb[0].mxu0
    %v878 = vadd.f32 %v800, %v877
    %879 = vdwg.mxu0
    %v880 = vand.u32 %v49, 4294901760
    %v881 = vsub.f32 %v49, %v880
    %v882 = vand.u32 %v881, 4294901760
    %883 = vmatprep.subr.mxu0 %v882
    %v884 = vand.u32 %v48, 4294901760
    %v885 = vsub.f32 %v48, %v884
    %v886 = vand.u32 %v885, 4294901760
    %887 = vmatpush1.msra.mxu0 %v886
    %v888 = vand.u32 %v53, 4294901760
    %v889 = vsub.f32 %v53, %v888
    %v890 = vand.u32 %v889, 4294901760
    %891 = vmatprep.subr.mxu0 %v890
    %v892 = vand.u32 %v52, 4294901760
    %v893 = vsub.f32 %v52, %v892
    %v894 = vand.u32 %v893, 4294901760
    %895 = vmatpush1.msra.mxu0 %v894
    %896 = vmatprep.subr.mxu0 0.0
    %897 = vmatpush1.msra.mxu0 0.0
    %898 = vmatprep.subr.mxu0 0.0
    %899 = vmatpush1.msra.mxu0 0.0
    %900 = vmatprep.subr.mxu0 0.0
    %901 = vmatpush1.msra.mxu0 0.0
    %902 = vmatprep.subr.mxu0 0.0
    %903 = vmatpush1.msra.mxu0 0.0
    %904 = vmatprep.subr.mxu0 0.0
    %905 = vmatpush1.msra.mxu0 0.0
    %906 = vmatprep.subr.mxu0 0.0
    %907 = vmatpush1.msra.mxu0 0.0
    %908 = vmatprep.subr.mxu0 0.0
    %909 = vmatpush1.msra.mxu0 0.0
    %910 = vmatprep.subr.mxu0 0.0
    %911 = vmatpush1.msra.mxu0 0.0
    %912 = vmatprep.subr.mxu0 0.0
    %913 = vmatpush1.msra.mxu0 0.0
    %914 = vmatprep.subr.mxu0 0.0
    %915 = vmatpush1.msra.mxu0 0.0
    %916 = vmatprep.subr.mxu0 0.0
    %917 = vmatpush1.msra.mxu0 0.0
    %918 = vmatprep.subr.mxu0 0.0
    %919 = vmatpush1.msra.mxu0 0.0
    %920 = vmatprep.subr.mxu0 0.0
    %921 = vmatpush1.msra.mxu0 0.0
    %922 = vmatprep.subr.mxu0 0.0
    %923 = vmatpush1.msra.mxu0 0.0
    %924 = vmatprep.subr.mxu0 0.0
    %925 = vmatpush1.msra.mxu0 0.0
    %926 = vmatprep.subr.mxu0 0.0
    %927 = vmatpush1.msra.mxu0 0.0
    %928 = vmatprep.subr.mxu0 0.0
    %929 = vmatpush1.msra.mxu0 0.0
    %930 = vmatprep.subr.mxu0 0.0
    %931 = vmatpush1.msra.mxu0 0.0
    %932 = vmatprep.subr.mxu0 0.0
    %933 = vmatpush1.msra.mxu0 0.0
    %934 = vmatprep.subr.mxu0 0.0
    %935 = vmatpush1.msra.mxu0 0.0
    %936 = vmatprep.subr.mxu0 0.0
    %937 = vmatpush1.msra.mxu0 0.0
    %938 = vmatprep.subr.mxu0 0.0
    %939 = vmatpush1.msra.mxu0 0.0
    %940 = vmatprep.subr.mxu0 0.0
    %941 = vmatpush1.msra.mxu0 0.0
    %942 = vmatprep.subr.mxu0 0.0
    %943 = vmatpush1.msra.mxu0 0.0
    %944 = vmatprep.subr.mxu0 0.0
    %945 = vmatpush1.msra.mxu0 0.0
    %946 = vmatprep.subr.mxu0 0.0
    %947 = vmatpush1.msra.mxu0 0.0
    %948 = vmatprep.subr.mxu0 0.0
    %949 = vmatpush1.msra.mxu0 0.0
    %950 = vmatprep.subr.mxu0 0.0
    %951 = vmatpush1.msra.mxu0 0.0
    %952 = vmatprep.subr.mxu0 0.0
    %953 = vmatpush1.msra.mxu0 0.0
    %954 = vmatprep.subr.mxu0 0.0
    %955 = vmatpush1.msra.mxu0 0.0
    %956 = vmatprep.mubr.f32.mxu0 0.0
    %v957 = vand.u32 %v56, 4294901760
    %958 = vmatmul.mubr.f32.gmra.mrb[0].mxu0 %v957
    %v959 = vpop.f32.mrb[0].mxu0
    %v960 = vadd.f32 %v876, %v959
    %v961 = vpop.f32.mrb[0].mxu0
    %v962 = vadd.f32 %v878, %v961
    %963 = vdwg.mxu0
    %v964 = vand.u32 %v49, 4294901760
    %965 = vmatprep.subr.mxu0 %v964
    %v966 = vand.u32 %v48, 4294901760
    %967 = vmatpush1.msra.mxu0 %v966
    %v968 = vand.u32 %v53, 4294901760
    %969 = vmatprep.subr.mxu0 %v968
    %v970 = vand.u32 %v52, 4294901760
    %971 = vmatpush1.msra.mxu0 %v970
    %972 = vmatprep.subr.mxu0 0.0
    %973 = vmatpush1.msra.mxu0 0.0
    %974 = vmatprep.subr.mxu0 0.0
    %975 = vmatpush1.msra.mxu0 0.0
    %976 = vmatprep.subr.mxu0 0.0
    %977 = vmatpush1.msra.mxu0 0.0
    %978 = vmatprep.subr.mxu0 0.0
    %979 = vmatpush1.msra.mxu0 0.0
    %980 = vmatprep.subr.mxu0 0.0
    %981 = vmatpush1.msra.mxu0 0.0
    %982 = vmatprep.subr.mxu0 0.0
    %983 = vmatpush1.msra.mxu0 0.0
    %984 = vmatprep.subr.mxu0 0.0
    %985 = vmatpush1.msra.mxu0 0.0
    %986 = vmatprep.subr.mxu0 0.0
    %987 = vmatpush1.msra.mxu0 0.0
    %988 = vmatprep.subr.mxu0 0.0
    %989 = vmatpush1.msra.mxu0 0.0
    %990 = vmatprep.subr.mxu0 0.0
    %991 = vmatpush1.msra.mxu0 0.0
    %992 = vmatprep.subr.mxu0 0.0
    %993 = vmatpush1.msra.mxu0 0.0
    %994 = vmatprep.subr.mxu0 0.0
    %995 = vmatpush1.msra.mxu0 0.0
    %996 = vmatprep.subr.mxu0 0.0
    %997 = vmatpush1.msra.mxu0 0.0
    %998 = vmatprep.subr.mxu0 0.0
    %999 = vmatpush1.msra.mxu0 0.0
    %1000 = vmatprep.subr.mxu0 0.0
    %1001 = vmatpush1.msra.mxu0 0.0
    %1002 = vmatprep.subr.mxu0 0.0
    %1003 = vmatpush1.msra.mxu0 0.0
    %1004 = vmatprep.subr.mxu0 0.0
    %1005 = vmatpush1.msra.mxu0 0.0
    %1006 = vmatprep.subr.mxu0 0.0
    %1007 = vmatpush1.msra.mxu0 0.0
    %1008 = vmatprep.subr.mxu0 0.0
    %1009 = vmatpush1.msra.mxu0 0.0
    %1010 = vmatprep.subr.mxu0 0.0
    %1011 = vmatpush1.msra.mxu0 0.0
    %1012 = vmatprep.subr.mxu0 0.0
    %1013 = vmatpush1.msra.mxu0 0.0
    %1014 = vmatprep.subr.mxu0 0.0
    %1015 = vmatpush1.msra.mxu0 0.0
    %1016 = vmatprep.subr.mxu0 0.0
    %1017 = vmatpush1.msra.mxu0 0.0
    %1018 = vmatprep.subr.mxu0 0.0
    %1019 = vmatpush1.msra.mxu0 0.0
    %1020 = vmatprep.subr.mxu0 0.0
    %1021 = vmatpush1.msra.mxu0 0.0
    %1022 = vmatprep.subr.mxu0 0.0
    %1023 = vmatpush1.msra.mxu0 0.0
    %1024 = vmatprep.subr.mxu0 0.0
    %1025 = vmatpush1.msra.mxu0 0.0
    %1026 = vmatprep.subr.mxu0 0.0
    %1027 = vmatpush1.msra.mxu0 0.0
    %1028 = vmatprep.subr.mxu0 0.0
    %1029 = vmatpush1.msra.mxu0 0.0
    %1030 = vmatprep.subr.mxu0 0.0
    %1031 = vmatpush1.msra.mxu0 0.0
    %1032 = vmatprep.mubr.f32.mxu0 0.0
    %v1033 = vand.u32 %v56, 4294901760
    %1034 = vmatmul.mubr.f32.gmra.mrb[0].mxu0 %v1033
    %v1035 = vpop.f32.mrb[0].mxu0
    %v1036 = vadd.f32 %v960, %v1035
    %v1037 = vpop.f32.mrb[0].mxu0
    %v1038 = vadd.f32 %v962, %v1037
    %1039 = vdwg.mxu0
    %vm1040 = vcmask 64512
    %v1042 = vsel %vm1040, %v39, 0
    %v1044 = vand.u32 %v43, 4294901760
    %1045 = vmatprep.subr.mxu0 %v1044
    %v1046 = vand.u32 %v42, 4294901760
    %1047 = vmatpush1.msra.mxu0 %v1046
    %1048 = vmatprep.subr.mxu0 0.0
    %1049 = vmatpush1.msra.mxu0 0.0
    %1050 = vmatprep.subr.mxu0 0.0
    %1051 = vmatpush1.msra.mxu0 0.0
    %1052 = vmatprep.subr.mxu0 0.0
    %1053 = vmatpush1.msra.mxu0 0.0
    %1054 = vmatprep.subr.mxu0 0.0
    %1055 = vmatpush1.msra.mxu0 0.0
    %1056 = vmatprep.subr.mxu0 0.0
    %1057 = vmatpush1.msra.mxu0 0.0
    %1058 = vmatprep.subr.mxu0 0.0
    %1059 = vmatpush1.msra.mxu0 0.0
    %1060 = vmatprep.subr.mxu0 0.0
    %1061 = vmatpush1.msra.mxu0 0.0
    %1062 = vmatprep.subr.mxu0 0.0
    %1063 = vmatpush1.msra.mxu0 0.0
    %1064 = vmatprep.subr.mxu0 0.0
    %1065 = vmatpush1.msra.mxu0 0.0
    %1066 = vmatprep.subr.mxu0 0.0
    %1067 = vmatpush1.msra.mxu0 0.0
    %1068 = vmatprep.subr.mxu0 0.0
    %1069 = vmatpush1.msra.mxu0 0.0
    %1070 = vmatprep.subr.mxu0 0.0
    %1071 = vmatpush1.msra.mxu0 0.0
    %1072 = vmatprep.subr.mxu0 0.0
    %1073 = vmatpush1.msra.mxu0 0.0
    %1074 = vmatprep.subr.mxu0 0.0
    %1075 = vmatpush1.msra.mxu0 0.0
    %1076 = vmatprep.subr.mxu0 0.0
    %1077 = vmatpush1.msra.mxu0 0.0
    %1078 = vmatprep.subr.mxu0 0.0
    %1079 = vmatpush1.msra.mxu0 0.0
    %1080 = vmatprep.subr.mxu0 0.0
    %1081 = vmatpush1.msra.mxu0 0.0
    %1082 = vmatprep.subr.mxu0 0.0
    %1083 = vmatpush1.msra.mxu0 0.0
    %1084 = vmatprep.subr.mxu0 0.0
    %1085 = vmatpush1.msra.mxu0 0.0
    %1086 = vmatprep.subr.mxu0 0.0
    %1087 = vmatpush1.msra.mxu0 0.0
    %1088 = vmatprep.subr.mxu0 0.0
    %1089 = vmatpush1.msra.mxu0 0.0
    %1090 = vmatprep.subr.mxu0 0.0
    %1091 = vmatpush1.msra.mxu0 0.0
    %1092 = vmatprep.subr.mxu0 0.0
    %1093 = vmatpush1.msra.mxu0 0.0
    %1094 = vmatprep.subr.mxu0 0.0
    %1095 = vmatpush1.msra.mxu0 0.0
    %1096 = vmatprep.subr.mxu0 0.0
    %1097 = vmatpush1.msra.mxu0 0.0
    %1098 = vmatprep.subr.mxu0 0.0
    %1099 = vmatpush1.msra.mxu0 0.0
    %1100 = vmatprep.subr.mxu0 0.0
    %1101 = vmatpush1.msra.mxu0 0.0
    %1102 = vmatprep.subr.mxu0 0.0
    %1103 = vmatpush1.msra.mxu0 0.0
    %1104 = vmatprep.subr.mxu0 0.0
    %1105 = vmatpush1.msra.mxu0 0.0
    %1106 = vmatprep.subr.mxu0 0.0
    %1107 = vmatpush1.msra.mxu0 0.0
    %1108 = vmatprep.subr.mxu0 0.0
    %1109 = vmatpush1.msra.mxu0 0.0
    %1110 = vmatprep.mubr.f32.mxu0 0.0
    %v1111 = vand.u32 %v1042, 4294901760
    %v1112 = vsub.f32 %v1042, %v1111
    %v1113 = vand.u32 %v1112, 4294901760
    %v1114 = vsub.f32 %v1112, %v1113
    %v1115 = vand.u32 %v1114, 4294901760
    %1116 = vmatmul.mubr.f32.gmra.mrb[0].mxu0 %v1115
    %v1117 = vpop.f32.mrb[0].mxu0
    %v1118 = vadd.f32 %v545, %v1117
    %v1119 = vpop.f32.mrb[0].mxu0
    %v1120 = vadd.f32 %v547, %v1119
    %1121 = vdwg.mxu0
    %v1122 = vand.u32 %v43, 4294901760
    %v1123 = vsub.f32 %v43, %v1122
    %v1124 = vand.u32 %v1123, 4294901760
    %v1125 = vsub.f32 %v1123, %v1124
    %v1126 = vand.u32 %v1125, 4294901760
    %1127 = vmatprep.subr.mxu0 %v1126
    %v1128 = vand.u32 %v42, 4294901760
    %v1129 = vsub.f32 %v42, %v1128
    %v1130 = vand.u32 %v1129, 4294901760
    %v1131 = vsub.f32 %v1129, %v1130
    %v1132 = vand.u32 %v1131, 4294901760
    %1133 = vmatpush1.msra.mxu0 %v1132
    %1134 = vmatprep.subr.mxu0 0.0
    %1135 = vmatpush1.msra.mxu0 0.0
    %1136 = vmatprep.subr.mxu0 0.0
    %1137 = vmatpush1.msra.mxu0 0.0
    %1138 = vmatprep.subr.mxu0 0.0
    %1139 = vmatpush1.msra.mxu0 0.0
    %1140 = vmatprep.subr.mxu0 0.0
    %1141 = vmatpush1.msra.mxu0 0.0
    %1142 = vmatprep.subr.mxu0 0.0
    %1143 = vmatpush1.msra.mxu0 0.0
    %1144 = vmatprep.subr.mxu0 0.0
    %1145 = vmatpush1.msra.mxu0 0.0
    %1146 = vmatprep.subr.mxu0 0.0
    %1147 = vmatpush1.msra.mxu0 0.0
    %1148 = vmatprep.subr.mxu0 0.0
    %1149 = vmatpush1.msra.mxu0 0.0
    %1150 = vmatprep.subr.mxu0 0.0
    %1151 = vmatpush1.msra.mxu0 0.0
    %1152 = vmatprep.subr.mxu0 0.0
    %1153 = vmatpush1.msra.mxu0 0.0
    %1154 = vmatprep.subr.mxu0 0.0
    %1155 = vmatpush1.msra.mxu0 0.0
    %1156 = vmatprep.subr.mxu0 0.0
    %1157 = vmatpush1.msra.mxu0 0.0
    %1158 = vmatprep.subr.mxu0 0.0
    %1159 = vmatpush1.msra.mxu0 0.0
    %1160 = vmatprep.subr.mxu0 0.0
    %1161 = vmatpush1.msra.mxu0 0.0
    %1162 = vmatprep.subr.mxu0 0.0
    %1163 = vmatpush1.msra.mxu0 0.0
    %1164 = vmatprep.subr.mxu0 0.0
    %1165 = vmatpush1.msra.mxu0 0.0
    %1166 = vmatprep.subr.mxu0 0.0
    %1167 = vmatpush1.msra.mxu0 0.0
    %1168 = vmatprep.subr.mxu0 0.0
    %1169 = vmatpush1.msra.mxu0 0.0
    %1170 = vmatprep.subr.mxu0 0.0
    %1171 = vmatpush1.msra.mxu0 0.0
    %1172 = vmatprep.subr.mxu0 0.0
    %1173 = vmatpush1.msra.mxu0 0.0
    %1174 = vmatprep.subr.mxu0 0.0
    %1175 = vmatpush1.msra.mxu0 0.0
    %1176 = vmatprep.subr.mxu0 0.0
    %1177 = vmatpush1.msra.mxu0 0.0
    %1178 = vmatprep.subr.mxu0 0.0
    %1179 = vmatpush1.msra.mxu0 0.0
    %1180 = vmatprep.subr.mxu0 0.0
    %1181 = vmatpush1.msra.mxu0 0.0
    %1182 = vmatprep.subr.mxu0 0.0
    %1183 = vmatpush1.msra.mxu0 0.0
    %1184 = vmatprep.subr.mxu0 0.0
    %1185 = vmatpush1.msra.mxu0 0.0
    %1186 = vmatprep.subr.mxu0 0.0
    %1187 = vmatpush1.msra.mxu0 0.0
    %1188 = vmatprep.subr.mxu0 0.0
    %1189 = vmatpush1.msra.mxu0 0.0
    %1190 = vmatprep.subr.mxu0 0.0
    %1191 = vmatpush1.msra.mxu0 0.0
    %1192 = vmatprep.subr.mxu0 0.0
    %1193 = vmatpush1.msra.mxu0 0.0
    %1194 = vmatprep.subr.mxu0 0.0
    %1195 = vmatpush1.msra.mxu0 0.0
    %1196 = vmatprep.mubr.f32.mxu0 0.0
    %v1197 = vand.u32 %v1042, 4294901760
    %1198 = vmatmul.mubr.f32.gmra.mrb[0].mxu0 %v1197
    %v1199 = vpop.f32.mrb[0].mxu0
    %v1200 = vadd.f32 %v1118, %v1199
    %v1201 = vpop.f32.mrb[0].mxu0
    %v1202 = vadd.f32 %v1120, %v1201
    %1203 = vdwg.mxu0
    %v1204 = vand.u32 %v43, 4294901760
    %v1205 = vsub.f32 %v43, %v1204
    %1206 = vmatprep.subr.mxu0 %v1205
    %v1207 = vand.u32 %v42, 4294901760
    %v1208 = vsub.f32 %v42, %v1207
    %1209 = vmatpush1.msra.mxu0 %v1208
    %1210 = vmatprep.subr.mxu0 0.0
    %1211 = vmatpush1.msra.mxu0 0.0
    %1212 = vmatprep.subr.mxu0 0.0
    %1213 = vmatpush1.msra.mxu0 0.0
    %1214 = vmatprep.subr.mxu0 0.0
    %1215 = vmatpush1.msra.mxu0 0.0
    %1216 = vmatprep.subr.mxu0 0.0
    %1217 = vmatpush1.msra.mxu0 0.0
    %1218 = vmatprep.subr.mxu0 0.0
    %1219 = vmatpush1.msra.mxu0 0.0
    %1220 = vmatprep.subr.mxu0 0.0
    %1221 = vmatpush1.msra.mxu0 0.0
    %1222 = vmatprep.subr.mxu0 0.0
    %1223 = vmatpush1.msra.mxu0 0.0
    %1224 = vmatprep.subr.mxu0 0.0
    %1225 = vmatpush1.msra.mxu0 0.0
    %1226 = vmatprep.subr.mxu0 0.0
    %1227 = vmatpush1.msra.mxu0 0.0
    %1228 = vmatprep.subr.mxu0 0.0
    %1229 = vmatpush1.msra.mxu0 0.0
    %1230 = vmatprep.subr.mxu0 0.0
    %1231 = vmatpush1.msra.mxu0 0.0
    %1232 = vmatprep.subr.mxu0 0.0
    %1233 = vmatpush1.msra.mxu0 0.0
    %1234 = vmatprep.subr.mxu0 0.0
    %1235 = vmatpush1.msra.mxu0 0.0
    %1236 = vmatprep.subr.mxu0 0.0
    %1237 = vmatpush1.msra.mxu0 0.0
    %1238 = vmatprep.subr.mxu0 0.0
    %1239 = vmatpush1.msra.mxu0 0.0
    %1240 = vmatprep.subr.mxu0 0.0
    %1241 = vmatpush1.msra.mxu0 0.0
    %1242 = vmatprep.subr.mxu0 0.0
    %1243 = vmatpush1.msra.mxu0 0.0
    %1244 = vmatprep.subr.mxu0 0.0
    %1245 = vmatpush1.msra.mxu0 0.0
    %1246 = vmatprep.subr.mxu0 0.0
    %1247 = vmatpush1.msra.mxu0 0.0
    %1248 = vmatprep.subr.mxu0 0.0
    %1249 = vmatpush1.msra.mxu0 0.0
    %1250 = vmatprep.subr.mxu0 0.0
    %1251 = vmatpush1.msra.mxu0 0.0
    %1252 = vmatprep.subr.mxu0 0.0
    %1253 = vmatpush1.msra.mxu0 0.0
    %1254 = vmatprep.subr.mxu0 0.0
    %1255 = vmatpush1.msra.mxu0 0.0
    %1256 = vmatprep.subr.mxu0 0.0
    %1257 = vmatpush1.msra.mxu0 0.0
    %1258 = vmatprep.subr.mxu0 0.0
    %1259 = vmatpush1.msra.mxu0 0.0
    %1260 = vmatprep.subr.mxu0 0.0
    %1261 = vmatpush1.msra.mxu0 0.0
    %1262 = vmatprep.subr.mxu0 0.0
    %1263 = vmatpush1.msra.mxu0 0.0
    %1264 = vmatprep.subr.mxu0 0.0
    %1265 = vmatpush1.msra.mxu0 0.0
    %1266 = vmatprep.subr.mxu0 0.0
    %1267 = vmatpush1.msra.mxu0 0.0
    %1268 = vmatprep.subr.mxu0 0.0
    %1269 = vmatpush1.msra.mxu0 0.0
    %1270 = vmatprep.subr.mxu0 0.0
    %1271 = vmatpush1.msra.mxu0 0.0
    %1272 = vmatprep.mubr.f32.mxu0 0.0
    %v1273 = vand.u32 %v1042, 4294901760
    %v1274 = vsub.f32 %v1042, %v1273
    %1275 = vmatmul.mubr.f32.gmra.mrb[0].mxu0 %v1274
    %v1276 = vpop.f32.mrb[0].mxu0
    %v1277 = vadd.f32 %v1200, %v1276
    %v1278 = vpop.f32.mrb[0].mxu0
    %v1279 = vadd.f32 %v1202, %v1278
    %1280 = vdwg.mxu0
    %v1281 = vand.u32 %v43, 4294901760
    %1282 = vmatprep.subr.mxu0 %v1281
    %v1283 = vand.u32 %v42, 4294901760
    %1284 = vmatpush1.msra.mxu0 %v1283
    %1285 = vmatprep.subr.mxu0 0.0
    %1286 = vmatpush1.msra.mxu0 0.0
    %1287 = vmatprep.subr.mxu0 0.0
    %1288 = vmatpush1.msra.mxu0 0.0
    %1289 = vmatprep.subr.mxu0 0.0
    %1290 = vmatpush1.msra.mxu0 0.0
    %1291 = vmatprep.subr.mxu0 0.0
    %1292 = vmatpush1.msra.mxu0 0.0
    %1293 = vmatprep.subr.mxu0 0.0
    %1294 = vmatpush1.msra.mxu0 0.0
    %1295 = vmatprep.subr.mxu0 0.0
    %1296 = vmatpush1.msra.mxu0 0.0
    %1297 = vmatprep.subr.mxu0 0.0
    %1298 = vmatpush1.msra.mxu0 0.0
    %1299 = vmatprep.subr.mxu0 0.0
    %1300 = vmatpush1.msra.mxu0 0.0
    %1301 = vmatprep.subr.mxu0 0.0
    %1302 = vmatpush1.msra.mxu0 0.0
    %1303 = vmatprep.subr.mxu0 0.0
    %1304 = vmatpush1.msra.mxu0 0.0
    %1305 = vmatprep.subr.mxu0 0.0
    %1306 = vmatpush1.msra.mxu0 0.0
    %1307 = vmatprep.subr.mxu0 0.0
    %1308 = vmatpush1.msra.mxu0 0.0
    %1309 = vmatprep.subr.mxu0 0.0
    %1310 = vmatpush1.msra.mxu0 0.0
    %1311 = vmatprep.subr.mxu0 0.0
    %1312 = vmatpush1.msra.mxu0 0.0
    %1313 = vmatprep.subr.mxu0 0.0
    %1314 = vmatpush1.msra.mxu0 0.0
    %1315 = vmatprep.subr.mxu0 0.0
    %1316 = vmatpush1.msra.mxu0 0.0
    %1317 = vmatprep.subr.mxu0 0.0
    %1318 = vmatpush1.msra.mxu0 0.0
    %1319 = vmatprep.subr.mxu0 0.0
    %1320 = vmatpush1.msra.mxu0 0.0
    %1321 = vmatprep.subr.mxu0 0.0
    %1322 = vmatpush1.msra.mxu0 0.0
    %1323 = vmatprep.subr.mxu0 0.0
    %1324 = vmatpush1.msra.mxu0 0.0
    %1325 = vmatprep.subr.mxu0 0.0
    %1326 = vmatpush1.msra.mxu0 0.0
    %1327 = vmatprep.subr.mxu0 0.0
    %1328 = vmatpush1.msra.mxu0 0.0
    %1329 = vmatprep.subr.mxu0 0.0
    %1330 = vmatpush1.msra.mxu0 0.0
    %1331 = vmatprep.subr.mxu0 0.0
    %1332 = vmatpush1.msra.mxu0 0.0
    %1333 = vmatprep.subr.mxu0 0.0
    %1334 = vmatpush1.msra.mxu0 0.0
    %1335 = vmatprep.subr.mxu0 0.0
    %1336 = vmatpush1.msra.mxu0 0.0
    %1337 = vmatprep.subr.mxu0 0.0
    %1338 = vmatpush1.msra.mxu0 0.0
    %1339 = vmatprep.subr.mxu0 0.0
    %1340 = vmatpush1.msra.mxu0 0.0
    %1341 = vmatprep.subr.mxu0 0.0
    %1342 = vmatpush1.msra.mxu0 0.0
    %1343 = vmatprep.subr.mxu0 0.0
    %1344 = vmatpush1.msra.mxu0 0.0
    %1345 = vmatprep.subr.mxu0 0.0
    %1346 = vmatpush1.msra.mxu0 0.0
    %1347 = vmatprep.mubr.f32.mxu0 0.0
    %v1348 = vand.u32 %v1042, 4294901760
    %v1349 = vsub.f32 %v1042, %v1348
    %v1350 = vand.u32 %v1349, 4294901760
    %1351 = vmatmul.mubr.f32.gmra.mrb[0].mxu0 %v1350
    %v1352 = vpop.f32.mrb[0].mxu0
    %v1353 = vadd.f32 %v1277, %v1352
    %v1354 = vpop.f32.mrb[0].mxu0
    %v1355 = vadd.f32 %v1279, %v1354
    %1356 = vdwg.mxu0
    %v1357 = vand.u32 %v43, 4294901760
    %v1358 = vsub.f32 %v43, %v1357
    %v1359 = vand.u32 %v1358, 4294901760
    %1360 = vmatprep.subr.mxu0 %v1359
    %v1361 = vand.u32 %v42, 4294901760
    %v1362 = vsub.f32 %v42, %v1361
    %v1363 = vand.u32 %v1362, 4294901760
    %1364 = vmatpush1.msra.mxu0 %v1363
    %1365 = vmatprep.subr.mxu0 0.0
    %1366 = vmatpush1.msra.mxu0 0.0
    %1367 = vmatprep.subr.mxu0 0.0
    %1368 = vmatpush1.msra.mxu0 0.0
    %1369 = vmatprep.subr.mxu0 0.0
    %1370 = vmatpush1.msra.mxu0 0.0
    %1371 = vmatprep.subr.mxu0 0.0
    %1372 = vmatpush1.msra.mxu0 0.0
    %1373 = vmatprep.subr.mxu0 0.0
    %1374 = vmatpush1.msra.mxu0 0.0
    %1375 = vmatprep.subr.mxu0 0.0
    %1376 = vmatpush1.msra.mxu0 0.0
    %1377 = vmatprep.subr.mxu0 0.0
    %1378 = vmatpush1.msra.mxu0 0.0
    %1379 = vmatprep.subr.mxu0 0.0
    %1380 = vmatpush1.msra.mxu0 0.0
    %1381 = vmatprep.subr.mxu0 0.0
    %1382 = vmatpush1.msra.mxu0 0.0
    %1383 = vmatprep.subr.mxu0 0.0
    %1384 = vmatpush1.msra.mxu0 0.0
    %1385 = vmatprep.subr.mxu0 0.0
    %1386 = vmatpush1.msra.mxu0 0.0
    %1387 = vmatprep.subr.mxu0 0.0
    %1388 = vmatpush1.msra.mxu0 0.0
    %1389 = vmatprep.subr.mxu0 0.0
    %1390 = vmatpush1.msra.mxu0 0.0
    %1391 = vmatprep.subr.mxu0 0.0
    %1392 = vmatpush1.msra.mxu0 0.0
    %1393 = vmatprep.subr.mxu0 0.0
    %1394 = vmatpush1.msra.mxu0 0.0
    %1395 = vmatprep.subr.mxu0 0.0
    %1396 = vmatpush1.msra.mxu0 0.0
    %1397 = vmatprep.subr.mxu0 0.0
    %1398 = vmatpush1.msra.mxu0 0.0
    %1399 = vmatprep.subr.mxu0 0.0
    %1400 = vmatpush1.msra.mxu0 0.0
    %1401 = vmatprep.subr.mxu0 0.0
    %1402 = vmatpush1.msra.mxu0 0.0
    %1403 = vmatprep.subr.mxu0 0.0
    %1404 = vmatpush1.msra.mxu0 0.0
    %1405 = vmatprep.subr.mxu0 0.0
    %1406 = vmatpush1.msra.mxu0 0.0
    %1407 = vmatprep.subr.mxu0 0.0
    %1408 = vmatpush1.msra.mxu0 0.0
    %1409 = vmatprep.subr.mxu0 0.0
    %1410 = vmatpush1.msra.mxu0 0.0
    %1411 = vmatprep.subr.mxu0 0.0
    %1412 = vmatpush1.msra.mxu0 0.0
    %1413 = vmatprep.subr.mxu0 0.0
    %1414 = vmatpush1.msra.mxu0 0.0
    %1415 = vmatprep.subr.mxu0 0.0
    %1416 = vmatpush1.msra.mxu0 0.0
    %1417 = vmatprep.subr.mxu0 0.0
    %1418 = vmatpush1.msra.mxu0 0.0
    %1419 = vmatprep.subr.mxu0 0.0
    %1420 = vmatpush1.msra.mxu0 0.0
    %1421 = vmatprep.subr.mxu0 0.0
    %1422 = vmatpush1.msra.mxu0 0.0
    %1423 = vmatprep.subr.mxu0 0.0
    %1424 = vmatpush1.msra.mxu0 0.0
    %1425 = vmatprep.subr.mxu0 0.0
    %1426 = vmatpush1.msra.mxu0 0.0
    %1427 = vmatprep.mubr.f32.mxu0 0.0
    %v1428 = vand.u32 %v1042, 4294901760
    %1429 = vmatmul.mubr.f32.gmra.mrb[0].mxu0 %v1428
    %v1430 = vpop.f32.mrb[0].mxu0
    %v1431 = vadd.f32 %v1353, %v1430
    %v1432 = vpop.f32.mrb[0].mxu0
    %v1433 = vadd.f32 %v1355, %v1432
    %1434 = vdwg.mxu0
    %v1435 = vand.u32 %v43, 4294901760
    %1436 = vmatprep.subr.mxu0 %v1435
    %v1437 = vand.u32 %v42, 4294901760
    %1438 = vmatpush1.msra.mxu0 %v1437
    %1439 = vmatprep.subr.mxu0 0.0
    %1440 = vmatpush1.msra.mxu0 0.0
    %1441 = vmatprep.subr.mxu0 0.0
    %1442 = vmatpush1.msra.mxu0 0.0
    %1443 = vmatprep.subr.mxu0 0.0
    %1444 = vmatpush1.msra.mxu0 0.0
    %1445 = vmatprep.subr.mxu0 0.0
    %1446 = vmatpush1.msra.mxu0 0.0
    %1447 = vmatprep.subr.mxu0 0.0
    %1448 = vmatpush1.msra.mxu0 0.0
    %1449 = vmatprep.subr.mxu0 0.0
    %1450 = vmatpush1.msra.mxu0 0.0
    %1451 = vmatprep.subr.mxu0 0.0
    %1452 = vmatpush1.msra.mxu0 0.0
    %1453 = vmatprep.subr.mxu0 0.0
    %1454 = vmatpush1.msra.mxu0 0.0
    %1455 = vmatprep.subr.mxu0 0.0
    %1456 = vmatpush1.msra.mxu0 0.0
    %1457 = vmatprep.subr.mxu0 0.0
    %1458 = vmatpush1.msra.mxu0 0.0
    %1459 = vmatprep.subr.mxu0 0.0
    %1460 = vmatpush1.msra.mxu0 0.0
    %1461 = vmatprep.subr.mxu0 0.0
    %1462 = vmatpush1.msra.mxu0 0.0
    %1463 = vmatprep.subr.mxu0 0.0
    %1464 = vmatpush1.msra.mxu0 0.0
    %1465 = vmatprep.subr.mxu0 0.0
    %1466 = vmatpush1.msra.mxu0 0.0
    %1467 = vmatprep.subr.mxu0 0.0
    %1468 = vmatpush1.msra.mxu0 0.0
    %1469 = vmatprep.subr.mxu0 0.0
    %1470 = vmatpush1.msra.mxu0 0.0
    %1471 = vmatprep.subr.mxu0 0.0
    %1472 = vmatpush1.msra.mxu0 0.0
    %1473 = vmatprep.subr.mxu0 0.0
    %1474 = vmatpush1.msra.mxu0 0.0
    %1475 = vmatprep.subr.mxu0 0.0
    %1476 = vmatpush1.msra.mxu0 0.0
    %1477 = vmatprep.subr.mxu0 0.0
    %1478 = vmatpush1.msra.mxu0 0.0
    %1479 = vmatprep.subr.mxu0 0.0
    %1480 = vmatpush1.msra.mxu0 0.0
    %1481 = vmatprep.subr.mxu0 0.0
    %1482 = vmatpush1.msra.mxu0 0.0
    %1483 = vmatprep.subr.mxu0 0.0
    %1484 = vmatpush1.msra.mxu0 0.0
    %1485 = vmatprep.subr.mxu0 0.0
    %1486 = vmatpush1.msra.mxu0 0.0
    %1487 = vmatprep.subr.mxu0 0.0
    %1488 = vmatpush1.msra.mxu0 0.0
    %1489 = vmatprep.subr.mxu0 0.0
    %1490 = vmatpush1.msra.mxu0 0.0
    %1491 = vmatprep.subr.mxu0 0.0
    %1492 = vmatpush1.msra.mxu0 0.0
    %1493 = vmatprep.subr.mxu0 0.0
    %1494 = vmatpush1.msra.mxu0 0.0
    %1495 = vmatprep.subr.mxu0 0.0
    %1496 = vmatpush1.msra.mxu0 0.0
    %1497 = vmatprep.subr.mxu0 0.0
    %1498 = vmatpush1.msra.mxu0 0.0
    %1499 = vmatprep.subr.mxu0 0.0
    %1500 = vmatpush1.msra.mxu0 0.0
    %1501 = vmatprep.mubr.f32.mxu0 0.0
    %v1502 = vand.u32 %v1042, 4294901760
    %1503 = vmatmul.mubr.f32.gmra.mrb[0].mxu0 %v1502
    %v1504 = vpop.f32.mrb[0].mxu0
    %v1505 = vadd.f32 %v1431, %v1504
    %v1506 = vpop.f32.mrb[0].mxu0
    %v1507 = vadd.f32 %v1433, %v1506
    %1508 = vdwg.mxu0
    %v1509 = vand.u32 %v45, 4294901760
    %1510 = vmatprep.subr.mxu0 %v1509
    %v1511 = vand.u32 %v44, 4294901760
    %1512 = vmatpush1.msra.mxu0 %v1511
    %1513 = vmatprep.subr.mxu0 0.0
    %1514 = vmatpush1.msra.mxu0 0.0
    %1515 = vmatprep.subr.mxu0 0.0
    %1516 = vmatpush1.msra.mxu0 0.0
    %1517 = vmatprep.subr.mxu0 0.0
    %1518 = vmatpush1.msra.mxu0 0.0
    %1519 = vmatprep.subr.mxu0 0.0
    %1520 = vmatpush1.msra.mxu0 0.0
    %1521 = vmatprep.subr.mxu0 0.0
    %1522 = vmatpush1.msra.mxu0 0.0
    %1523 = vmatprep.subr.mxu0 0.0
    %1524 = vmatpush1.msra.mxu0 0.0
    %1525 = vmatprep.subr.mxu0 0.0
    %1526 = vmatpush1.msra.mxu0 0.0
    %1527 = vmatprep.subr.mxu0 0.0
    %1528 = vmatpush1.msra.mxu0 0.0
    %1529 = vmatprep.subr.mxu0 0.0
    %1530 = vmatpush1.msra.mxu0 0.0
    %1531 = vmatprep.subr.mxu0 0.0
    %1532 = vmatpush1.msra.mxu0 0.0
    %1533 = vmatprep.subr.mxu0 0.0
    %1534 = vmatpush1.msra.mxu0 0.0
    %1535 = vmatprep.subr.mxu0 0.0
    %1536 = vmatpush1.msra.mxu0 0.0
    %1537 = vmatprep.subr.mxu0 0.0
    %1538 = vmatpush1.msra.mxu0 0.0
    %1539 = vmatprep.subr.mxu0 0.0
    %1540 = vmatpush1.msra.mxu0 0.0
    %1541 = vmatprep.subr.mxu0 0.0
    %1542 = vmatpush1.msra.mxu0 0.0
    %1543 = vmatprep.subr.mxu0 0.0
    %1544 = vmatpush1.msra.mxu0 0.0
    %1545 = vmatprep.subr.mxu0 0.0
    %1546 = vmatpush1.msra.mxu0 0.0
    %1547 = vmatprep.subr.mxu0 0.0
    %1548 = vmatpush1.msra.mxu0 0.0
    %1549 = vmatprep.subr.mxu0 0.0
    %1550 = vmatpush1.msra.mxu0 0.0
    %1551 = vmatprep.subr.mxu0 0.0
    %1552 = vmatpush1.msra.mxu0 0.0
    %1553 = vmatprep.subr.mxu0 0.0
    %1554 = vmatpush1.msra.mxu0 0.0
    %1555 = vmatprep.subr.mxu0 0.0
    %1556 = vmatpush1.msra.mxu0 0.0
    %1557 = vmatprep.subr.mxu0 0.0
    %1558 = vmatpush1.msra.mxu0 0.0
    %1559 = vmatprep.subr.mxu0 0.0
    %1560 = vmatpush1.msra.mxu0 0.0
    %1561 = vmatprep.subr.mxu0 0.0
    %1562 = vmatpush1.msra.mxu0 0.0
    %1563 = vmatprep.subr.mxu0 0.0
    %1564 = vmatpush1.msra.mxu0 0.0
    %1565 = vmatprep.subr.mxu0 0.0
    %1566 = vmatpush1.msra.mxu0 0.0
    %1567 = vmatprep.subr.mxu0 0.0
    %1568 = vmatpush1.msra.mxu0 0.0
    %1569 = vmatprep.subr.mxu0 0.0
    %1570 = vmatpush1.msra.mxu0 0.0
    %1571 = vmatprep.subr.mxu0 0.0
    %1572 = vmatpush1.msra.mxu0 0.0
    %1573 = vmatprep.subr.mxu0 0.0
    %1574 = vmatpush1.msra.mxu0 0.0
    %1575 = vmatprep.mubr.f32.mxu0 0.0
    %v1576 = vand.u32 %v1042, 4294901760
    %v1577 = vsub.f32 %v1042, %v1576
    %v1578 = vand.u32 %v1577, 4294901760
    %v1579 = vsub.f32 %v1577, %v1578
    %v1580 = vand.u32 %v1579, 4294901760
    %1581 = vmatmul.mubr.f32.gmra.mrb[0].mxu0 %v1580
    %v1582 = vpop.f32.mrb[0].mxu0
    %v1583 = vadd.f32 %v1036, %v1582
    %v1584 = vpop.f32.mrb[0].mxu0
    %v1585 = vadd.f32 %v1038, %v1584
    %1586 = vdwg.mxu0
    %v1587 = vand.u32 %v45, 4294901760
    %v1588 = vsub.f32 %v45, %v1587
    %v1589 = vand.u32 %v1588, 4294901760
    %v1590 = vsub.f32 %v1588, %v1589
    %v1591 = vand.u32 %v1590, 4294901760
    %1592 = vmatprep.subr.mxu0 %v1591
    %v1593 = vand.u32 %v44, 4294901760
    %v1594 = vsub.f32 %v44, %v1593
    %v1595 = vand.u32 %v1594, 4294901760
    %v1596 = vsub.f32 %v1594, %v1595
    %v1597 = vand.u32 %v1596, 4294901760
    %1598 = vmatpush1.msra.mxu0 %v1597
    %1599 = vmatprep.subr.mxu0 0.0
    %1600 = vmatpush1.msra.mxu0 0.0
    %1601 = vmatprep.subr.mxu0 0.0
    %1602 = vmatpush1.msra.mxu0 0.0
    %1603 = vmatprep.subr.mxu0 0.0
    %1604 = vmatpush1.msra.mxu0 0.0
    %1605 = vmatprep.subr.mxu0 0.0
    %1606 = vmatpush1.msra.mxu0 0.0
    %1607 = vmatprep.subr.mxu0 0.0
    %1608 = vmatpush1.msra.mxu0 0.0
    %1609 = vmatprep.subr.mxu0 0.0
    %1610 = vmatpush1.msra.mxu0 0.0
    %1611 = vmatprep.subr.mxu0 0.0
    %1612 = vmatpush1.msra.mxu0 0.0
    %1613 = vmatprep.subr.mxu0 0.0
    %1614 = vmatpush1.msra.mxu0 0.0
    %1615 = vmatprep.subr.mxu0 0.0
    %1616 = vmatpush1.msra.mxu0 0.0
    %1617 = vmatprep.subr.mxu0 0.0
    %1618 = vmatpush1.msra.mxu0 0.0
    %1619 = vmatprep.subr.mxu0 0.0
    %1620 = vmatpush1.msra.mxu0 0.0
    %1621 = vmatprep.subr.mxu0 0.0
    %1622 = vmatpush1.msra.mxu0 0.0
    %1623 = vmatprep.subr.mxu0 0.0
    %1624 = vmatpush1.msra.mxu0 0.0
    %1625 = vmatprep.subr.mxu0 0.0
    %1626 = vmatpush1.msra.mxu0 0.0
    %1627 = vmatprep.subr.mxu0 0.0
    %1628 = vmatpush1.msra.mxu0 0.0
    %1629 = vmatprep.subr.mxu0 0.0
    %1630 = vmatpush1.msra.mxu0 0.0
    %1631 = vmatprep.subr.mxu0 0.0
    %1632 = vmatpush1.msra.mxu0 0.0
    %1633 = vmatprep.subr.mxu0 0.0
    %1634 = vmatpush1.msra.mxu0 0.0
    %1635 = vmatprep.subr.mxu0 0.0
    %1636 = vmatpush1.msra.mxu0 0.0
    %1637 = vmatprep.subr.mxu0 0.0
    %1638 = vmatpush1.msra.mxu0 0.0
    %1639 = vmatprep.subr.mxu0 0.0
    %1640 = vmatpush1.msra.mxu0 0.0
    %1641 = vmatprep.subr.mxu0 0.0
    %1642 = vmatpush1.msra.mxu0 0.0
    %1643 = vmatprep.subr.mxu0 0.0
    %1644 = vmatpush1.msra.mxu0 0.0
    %1645 = vmatprep.subr.mxu0 0.0
    %1646 = vmatpush1.msra.mxu0 0.0
    %1647 = vmatprep.subr.mxu0 0.0
    %1648 = vmatpush1.msra.mxu0 0.0
    %1649 = vmatprep.subr.mxu0 0.0
    %1650 = vmatpush1.msra.mxu0 0.0
    %1651 = vmatprep.subr.mxu0 0.0
    %1652 = vmatpush1.msra.mxu0 0.0
    %1653 = vmatprep.subr.mxu0 0.0
    %1654 = vmatpush1.msra.mxu0 0.0
    %1655 = vmatprep.subr.mxu0 0.0
    %1656 = vmatpush1.msra.mxu0 0.0
    %1657 = vmatprep.subr.mxu0 0.0
    %1658 = vmatpush1.msra.mxu0 0.0
    %1659 = vmatprep.subr.mxu0 0.0
    %1660 = vmatpush1.msra.mxu0 0.0
    %1661 = vmatprep.mubr.f32.mxu0 0.0
    %v1662 = vand.u32 %v1042, 4294901760
    %1663 = vmatmul.mubr.f32.gmra.mrb[0].mxu0 %v1662
    %v1664 = vpop.f32.mrb[0].mxu0
    %v1665 = vadd.f32 %v1583, %v1664
    %v1666 = vpop.f32.mrb[0].mxu0
    %v1667 = vadd.f32 %v1585, %v1666
    %1668 = vdwg.mxu0
    %v1669 = vand.u32 %v45, 4294901760
    %v1670 = vsub.f32 %v45, %v1669
    %1671 = vmatprep.subr.mxu0 %v1670
    %v1672 = vand.u32 %v44, 4294901760
    %v1673 = vsub.f32 %v44, %v1672
    %1674 = vmatpush1.msra.mxu0 %v1673
    %1675 = vmatprep.subr.mxu0 0.0
    %1676 = vmatpush1.msra.mxu0 0.0
    %1677 = vmatprep.subr.mxu0 0.0
    %1678 = vmatpush1.msra.mxu0 0.0
    %1679 = vmatprep.subr.mxu0 0.0
    %1680 = vmatpush1.msra.mxu0 0.0
    %1681 = vmatprep.subr.mxu0 0.0
    %1682 = vmatpush1.msra.mxu0 0.0
    %1683 = vmatprep.subr.mxu0 0.0
    %1684 = vmatpush1.msra.mxu0 0.0
    %1685 = vmatprep.subr.mxu0 0.0
    %1686 = vmatpush1.msra.mxu0 0.0
    %1687 = vmatprep.subr.mxu0 0.0
    %1688 = vmatpush1.msra.mxu0 0.0
    %1689 = vmatprep.subr.mxu0 0.0
    %1690 = vmatpush1.msra.mxu0 0.0
    %1691 = vmatprep.subr.mxu0 0.0
    %1692 = vmatpush1.msra.mxu0 0.0
    %1693 = vmatprep.subr.mxu0 0.0
    %1694 = vmatpush1.msra.mxu0 0.0
    %1695 = vmatprep.subr.mxu0 0.0
    %1696 = vmatpush1.msra.mxu0 0.0
    %1697 = vmatprep.subr.mxu0 0.0
    %1698 = vmatpush1.msra.mxu0 0.0
    %1699 = vmatprep.subr.mxu0 0.0
    %1700 = vmatpush1.msra.mxu0 0.0
    %1701 = vmatprep.subr.mxu0 0.0
    %1702 = vmatpush1.msra.mxu0 0.0
    %1703 = vmatprep.subr.mxu0 0.0
    %1704 = vmatpush1.msra.mxu0 0.0
    %1705 = vmatprep.subr.mxu0 0.0
    %1706 = vmatpush1.msra.mxu0 0.0
    %1707 = vmatprep.subr.mxu0 0.0
    %1708 = vmatpush1.msra.mxu0 0.0
    %1709 = vmatprep.subr.mxu0 0.0
    %1710 = vmatpush1.msra.mxu0 0.0
    %1711 = vmatprep.subr.mxu0 0.0
    %1712 = vmatpush1.msra.mxu0 0.0
    %1713 = vmatprep.subr.mxu0 0.0
    %1714 = vmatpush1.msra.mxu0 0.0
    %1715 = vmatprep.subr.mxu0 0.0
    %1716 = vmatpush1.msra.mxu0 0.0
    %1717 = vmatprep.subr.mxu0 0.0
    %1718 = vmatpush1.msra.mxu0 0.0
    %1719 = vmatprep.subr.mxu0 0.0
    %1720 = vmatpush1.msra.mxu0 0.0
    %1721 = vmatprep.subr.mxu0 0.0
    %1722 = vmatpush1.msra.mxu0 0.0
    %1723 = vmatprep.subr.mxu0 0.0
    %1724 = vmatpush1.msra.mxu0 0.0
    %1725 = vmatprep.subr.mxu0 0.0
    %1726 = vmatpush1.msra.mxu0 0.0
    %1727 = vmatprep.subr.mxu0 0.0
    %1728 = vmatpush1.msra.mxu0 0.0
    %1729 = vmatprep.subr.mxu0 0.0
    %1730 = vmatpush1.msra.mxu0 0.0
    %1731 = vmatprep.subr.mxu0 0.0
    %1732 = vmatpush1.msra.mxu0 0.0
    %1733 = vmatprep.subr.mxu0 0.0
    %1734 = vmatpush1.msra.mxu0 0.0
    %1735 = vmatprep.subr.mxu0 0.0
    %1736 = vmatpush1.msra.mxu0 0.0
    %1737 = vmatprep.mubr.f32.mxu0 0.0
    %v1738 = vand.u32 %v1042, 4294901760
    %v1739 = vsub.f32 %v1042, %v1738
    %1740 = vmatmul.mubr.f32.gmra.mrb[0].mxu0 %v1739
    %v1741 = vpop.f32.mrb[0].mxu0
    %v1742 = vadd.f32 %v1665, %v1741
    %v1743 = vpop.f32.mrb[0].mxu0
    %v1744 = vadd.f32 %v1667, %v1743
    %1745 = vdwg.mxu0
    %v1746 = vand.u32 %v45, 4294901760
    %1747 = vmatprep.subr.mxu0 %v1746
    %v1748 = vand.u32 %v44, 4294901760
    %1749 = vmatpush1.msra.mxu0 %v1748
    %1750 = vmatprep.subr.mxu0 0.0
    %1751 = vmatpush1.msra.mxu0 0.0
    %1752 = vmatprep.subr.mxu0 0.0
    %1753 = vmatpush1.msra.mxu0 0.0
    %1754 = vmatprep.subr.mxu0 0.0
    %1755 = vmatpush1.msra.mxu0 0.0
    %1756 = vmatprep.subr.mxu0 0.0
    %1757 = vmatpush1.msra.mxu0 0.0
    %1758 = vmatprep.subr.mxu0 0.0
    %1759 = vmatpush1.msra.mxu0 0.0
    %1760 = vmatprep.subr.mxu0 0.0
    %1761 = vmatpush1.msra.mxu0 0.0
    %1762 = vmatprep.subr.mxu0 0.0
    %1763 = vmatpush1.msra.mxu0 0.0
    %1764 = vmatprep.subr.mxu0 0.0
    %1765 = vmatpush1.msra.mxu0 0.0
    %1766 = vmatprep.subr.mxu0 0.0
    %1767 = vmatpush1.msra.mxu0 0.0
    %1768 = vmatprep.subr.mxu0 0.0
    %1769 = vmatpush1.msra.mxu0 0.0
    %1770 = vmatprep.subr.mxu0 0.0
    %1771 = vmatpush1.msra.mxu0 0.0
    %1772 = vmatprep.subr.mxu0 0.0
    %1773 = vmatpush1.msra.mxu0 0.0
    %1774 = vmatprep.subr.mxu0 0.0
    %1775 = vmatpush1.msra.mxu0 0.0
    %1776 = vmatprep.subr.mxu0 0.0
    %1777 = vmatpush1.msra.mxu0 0.0
    %1778 = vmatprep.subr.mxu0 0.0
    %1779 = vmatpush1.msra.mxu0 0.0
    %1780 = vmatprep.subr.mxu0 0.0
    %1781 = vmatpush1.msra.mxu0 0.0
    %1782 = vmatprep.subr.mxu0 0.0
    %1783 = vmatpush1.msra.mxu0 0.0
    %1784 = vmatprep.subr.mxu0 0.0
    %1785 = vmatpush1.msra.mxu0 0.0
    %1786 = vmatprep.subr.mxu0 0.0
    %1787 = vmatpush1.msra.mxu0 0.0
    %1788 = vmatprep.subr.mxu0 0.0
    %1789 = vmatpush1.msra.mxu0 0.0
    %1790 = vmatprep.subr.mxu0 0.0
    %1791 = vmatpush1.msra.mxu0 0.0
    %1792 = vmatprep.subr.mxu0 0.0
    %1793 = vmatpush1.msra.mxu0 0.0
    %1794 = vmatprep.subr.mxu0 0.0
    %1795 = vmatpush1.msra.mxu0 0.0
    %1796 = vmatprep.subr.mxu0 0.0
    %1797 = vmatpush1.msra.mxu0 0.0
    %1798 = vmatprep.subr.mxu0 0.0
    %1799 = vmatpush1.msra.mxu0 0.0
    %1800 = vmatprep.subr.mxu0 0.0
    %1801 = vmatpush1.msra.mxu0 0.0
    %1802 = vmatprep.subr.mxu0 0.0
    %1803 = vmatpush1.msra.mxu0 0.0
    %1804 = vmatprep.subr.mxu0 0.0
    %1805 = vmatpush1.msra.mxu0 0.0
    %1806 = vmatprep.subr.mxu0 0.0
    %1807 = vmatpush1.msra.mxu0 0.0
    %1808 = vmatprep.subr.mxu0 0.0
    %1809 = vmatpush1.msra.mxu0 0.0
    %1810 = vmatprep.subr.mxu0 0.0
    %1811 = vmatpush1.msra.mxu0 0.0
    %1812 = vmatprep.mubr.f32.mxu0 0.0
    %v1813 = vand.u32 %v1042, 4294901760
    %v1814 = vsub.f32 %v1042, %v1813
    %v1815 = vand.u32 %v1814, 4294901760
    %1816 = vmatmul.mubr.f32.gmra.mrb[0].mxu0 %v1815
    %v1817 = vpop.f32.mrb[0].mxu0
    %v1818 = vadd.f32 %v1742, %v1817
    %v1819 = vpop.f32.mrb[0].mxu0
    %v1820 = vadd.f32 %v1744, %v1819
    %1821 = vdwg.mxu0
    %v1822 = vand.u32 %v45, 4294901760
    %v1823 = vsub.f32 %v45, %v1822
    %v1824 = vand.u32 %v1823, 4294901760
    %1825 = vmatprep.subr.mxu0 %v1824
    %v1826 = vand.u32 %v44, 4294901760
    %v1827 = vsub.f32 %v44, %v1826
    %v1828 = vand.u32 %v1827, 4294901760
    %1829 = vmatpush1.msra.mxu0 %v1828
    %1830 = vmatprep.subr.mxu0 0.0
    %1831 = vmatpush1.msra.mxu0 0.0
    %1832 = vmatprep.subr.mxu0 0.0
    %1833 = vmatpush1.msra.mxu0 0.0
    %1834 = vmatprep.subr.mxu0 0.0
    %1835 = vmatpush1.msra.mxu0 0.0
    %1836 = vmatprep.subr.mxu0 0.0
    %1837 = vmatpush1.msra.mxu0 0.0
    %1838 = vmatprep.subr.mxu0 0.0
    %1839 = vmatpush1.msra.mxu0 0.0
    %1840 = vmatprep.subr.mxu0 0.0
    %1841 = vmatpush1.msra.mxu0 0.0
    %1842 = vmatprep.subr.mxu0 0.0
    %1843 = vmatpush1.msra.mxu0 0.0
    %1844 = vmatprep.subr.mxu0 0.0
    %1845 = vmatpush1.msra.mxu0 0.0
    %1846 = vmatprep.subr.mxu0 0.0
    %1847 = vmatpush1.msra.mxu0 0.0
    %1848 = vmatprep.subr.mxu0 0.0
    %1849 = vmatpush1.msra.mxu0 0.0
    %1850 = vmatprep.subr.mxu0 0.0
    %1851 = vmatpush1.msra.mxu0 0.0
    %1852 = vmatprep.subr.mxu0 0.0
    %1853 = vmatpush1.msra.mxu0 0.0
    %1854 = vmatprep.subr.mxu0 0.0
    %1855 = vmatpush1.msra.mxu0 0.0
    %1856 = vmatprep.subr.mxu0 0.0
    %1857 = vmatpush1.msra.mxu0 0.0
    %1858 = vmatprep.subr.mxu0 0.0
    %1859 = vmatpush1.msra.mxu0 0.0
    %1860 = vmatprep.subr.mxu0 0.0
    %1861 = vmatpush1.msra.mxu0 0.0
    %1862 = vmatprep.subr.mxu0 0.0
    %1863 = vmatpush1.msra.mxu0 0.0
    %1864 = vmatprep.subr.mxu0 0.0
    %1865 = vmatpush1.msra.mxu0 0.0
    %1866 = vmatprep.subr.mxu0 0.0
    %1867 = vmatpush1.msra.mxu0 0.0
    %1868 = vmatprep.subr.mxu0 0.0
    %1869 = vmatpush1.msra.mxu0 0.0
    %1870 = vmatprep.subr.mxu0 0.0
    %1871 = vmatpush1.msra.mxu0 0.0
    %1872 = vmatprep.subr.mxu0 0.0
    %1873 = vmatpush1.msra.mxu0 0.0
    %1874 = vmatprep.subr.mxu0 0.0
    %1875 = vmatpush1.msra.mxu0 0.0
    %1876 = vmatprep.subr.mxu0 0.0
    %1877 = vmatpush1.msra.mxu0 0.0
    %1878 = vmatprep.subr.mxu0 0.0
    %1879 = vmatpush1.msra.mxu0 0.0
    %1880 = vmatprep.subr.mxu0 0.0
    %1881 = vmatpush1.msra.mxu0 0.0
    %1882 = vmatprep.subr.mxu0 0.0
    %1883 = vmatpush1.msra.mxu0 0.0
    %1884 = vmatprep.subr.mxu0 0.0
    %1885 = vmatpush1.msra.mxu0 0.0
    %1886 = vmatprep.subr.mxu0 0.0
    %1887 = vmatpush1.msra.mxu0 0.0
    %1888 = vmatprep.subr.mxu0 0.0
    %1889 = vmatpush1.msra.mxu0 0.0
    %1890 = vmatprep.subr.mxu0 0.0
    %1891 = vmatpush1.msra.mxu0 0.0
    %1892 = vmatprep.mubr.f32.mxu0 0.0
    %v1893 = vand.u32 %v1042, 4294901760
    %1894 = vmatmul.mubr.f32.gmra.mrb[0].mxu0 %v1893
    %v1895 = vpop.f32.mrb[0].mxu0
    %v1896 = vadd.f32 %v1818, %v1895
    %v1897 = vpop.f32.mrb[0].mxu0
    %v1898 = vadd.f32 %v1820, %v1897
    %1899 = vdwg.mxu0
    %v1900 = vand.u32 %v45, 4294901760
    %1901 = vmatprep.subr.mxu0 %v1900
    %v1902 = vand.u32 %v44, 4294901760
    %1903 = vmatpush1.msra.mxu0 %v1902
    %1904 = vmatprep.subr.mxu0 0.0
    %1905 = vmatpush1.msra.mxu0 0.0
    %1906 = vmatprep.subr.mxu0 0.0
    %1907 = vmatpush1.msra.mxu0 0.0
    %1908 = vmatprep.subr.mxu0 0.0
    %1909 = vmatpush1.msra.mxu0 0.0
    %1910 = vmatprep.subr.mxu0 0.0
    %1911 = vmatpush1.msra.mxu0 0.0
    %1912 = vmatprep.subr.mxu0 0.0
    %1913 = vmatpush1.msra.mxu0 0.0
    %1914 = vmatprep.subr.mxu0 0.0
    %1915 = vmatpush1.msra.mxu0 0.0
    %1916 = vmatprep.subr.mxu0 0.0
    %1917 = vmatpush1.msra.mxu0 0.0
    %1918 = vmatprep.subr.mxu0 0.0
    %1919 = vmatpush1.msra.mxu0 0.0
    %1920 = vmatprep.subr.mxu0 0.0
    %1921 = vmatpush1.msra.mxu0 0.0
    %1922 = vmatprep.subr.mxu0 0.0
    %1923 = vmatpush1.msra.mxu0 0.0
    %1924 = vmatprep.subr.mxu0 0.0
    %1925 = vmatpush1.msra.mxu0 0.0
    %1926 = vmatprep.subr.mxu0 0.0
    %1927 = vmatpush1.msra.mxu0 0.0
    %1928 = vmatprep.subr.mxu0 0.0
    %1929 = vmatpush1.msra.mxu0 0.0
    %1930 = vmatprep.subr.mxu0 0.0
    %1931 = vmatpush1.msra.mxu0 0.0
    %1932 = vmatprep.subr.mxu0 0.0
    %1933 = vmatpush1.msra.mxu0 0.0
    %1934 = vmatprep.subr.mxu0 0.0
    %1935 = vmatpush1.msra.mxu0 0.0
    %1936 = vmatprep.subr.mxu0 0.0
    %1937 = vmatpush1.msra.mxu0 0.0
    %1938 = vmatprep.subr.mxu0 0.0
    %1939 = vmatpush1.msra.mxu0 0.0
    %1940 = vmatprep.subr.mxu0 0.0
    %1941 = vmatpush1.msra.mxu0 0.0
    %1942 = vmatprep.subr.mxu0 0.0
    %1943 = vmatpush1.msra.mxu0 0.0
    %1944 = vmatprep.subr.mxu0 0.0
    %1945 = vmatpush1.msra.mxu0 0.0
    %1946 = vmatprep.subr.mxu0 0.0
    %1947 = vmatpush1.msra.mxu0 0.0
    %1948 = vmatprep.subr.mxu0 0.0
    %1949 = vmatpush1.msra.mxu0 0.0
    %1950 = vmatprep.subr.mxu0 0.0
    %1951 = vmatpush1.msra.mxu0 0.0
    %1952 = vmatprep.subr.mxu0 0.0
    %1953 = vmatpush1.msra.mxu0 0.0
    %1954 = vmatprep.subr.mxu0 0.0
    %1955 = vmatpush1.msra.mxu0 0.0
    %1956 = vmatprep.subr.mxu0 0.0
    %1957 = vmatpush1.msra.mxu0 0.0
    %1958 = vmatprep.subr.mxu0 0.0
    %1959 = vmatpush1.msra.mxu0 0.0
    %1960 = vmatprep.subr.mxu0 0.0
    %1961 = vmatpush1.msra.mxu0 0.0
    %1962 = vmatprep.subr.mxu0 0.0
    %1963 = vmatpush1.msra.mxu0 0.0
    %1964 = vmatprep.subr.mxu0 0.0
    %1965 = vmatpush1.msra.mxu0 0.0
    %1966 = vmatprep.mubr.f32.mxu0 0.0
    %v1967 = vand.u32 %v1042, 4294901760
    %1968 = vmatmul.mubr.f32.gmra.mrb[0].mxu0 %v1967
    %v1969 = vpop.f32.mrb[0].mxu0
    %v1970 = vadd.f32 %v1896, %v1969
    %v1971 = vpop.f32.mrb[0].mxu0
    %v1972 = vadd.f32 %v1898, %v1971
    %1973 = vdwg.mxu0
    %s1974 = scalar_lea.vmem [#allocation2], 96
    %v1975 = vld [vmem:[%s1974] ss:$8 sm:$0xf]
    %v1977 = vlaneseq
    %v1978 = vshrl.u32 %v1977, 7
    %v1979 = vsub.s32 0, %v1978
    %v1980 = vrot.slane %v1975, %v1979
    %v1981 = vlaneseq
    %v1982 = vshrl.u32 %v1981, 7
    %v1983 = vsub.s32 1, %v1982
    %v1984 = vrot.slane %v1975, %v1983
    %v1985 = vlaneseq
    %v1986 = vshrl.u32 %v1985, 7
    %v1987 = vsub.s32 2, %v1986
    %v1988 = vrot.slane %v1975, %v1987
    %v1989 = vlaneseq
    %v1990 = vshrl.u32 %v1989, 7
    %v1991 = vsub.s32 3, %v1990
    %v1992 = vrot.slane %v1975, %v1991
    %v1997 = vadd.f32 %v1505, %v1980
    %v1998 = vadd.f32 %v1507, %v1984
    %v1999 = vadd.f32 %v1970, %v1988
    %v2000 = vadd.f32 %v1972, %v1992
    %v2001 = vxor.u32 %v1997, 2147483648
    %v2002 = vmul.f32 %v2001, 1.442695
    %v2003 = vpow.pop %v2002
    %v2004 = vadd.f32 %v2003, 1.0
    %v2005 = vrcp.pop %v2004
    %v2006 = vmul.f32 1.0, %v2005
    %v2007 = vxor.u32 %v1998, 2147483648
    %v2008 = vmul.f32 %v2007, 1.442695
    %v2009 = vpow.pop %v2008
    %v2010 = vadd.f32 %v2009, 1.0
    %v2011 = vrcp.pop %v2010
    %v2012 = vmul.f32 1.0, %v2011
    %v2013 = vtanh.pop %v1999
    %v2014 = vxor.u32 %v2000, 2147483648
    %v2015 = vmul.f32 %v2014, 1.442695
    %v2016 = vpow.pop %v2015
    %v2017 = vadd.f32 %v2016, 1.0
    %v2018 = vrcp.pop %v2017
    %v2019 = vmul.f32 1.0, %v2018
    %v2020 = vmul.f32 %v2012, %v41
    %v2021 = vmul.f32 %v2006, %v2013
    %v2022 = vadd.f32 %v2020, %v2021
    %v2023 = vtanh.pop %v2022
    %v2024 = vmul.f32 %v2019, %v2023
    %v2025 = vld [vmem:[%s4] sm:$0xff]
    %v2026 = vld [vmem:[%s4 + $0x8] sm:$0xff]
    %v2027 = vld [vmem:[%s4 + $0x10] sm:$0x1]
    %v2028 = vlaneseq
    %v2029 = vshrl.u32 %v2028, 7
    %v2030 = vsub.s32 0, %v2029
    %v2031 = vrot.slane %v2027, %v2030
    %v2033 = vsel %vm54, %v2024, 0
    %2035 = vmatprep.subr.mxu0 0.0
    %v2036 = vand.u32 %v2025, 4294901760
    %2037 = vmatpush1.msra.mxu0 %v2036
    %2038 = vmatprep.subr.mxu0 0.0
    %v2039 = vand.u32 %v2026, 4294901760
    %2040 = vmatpush1.msra.mxu0 %v2039
    %2041 = vmatprep.subr.mxu0 0.0
    %2042 = vmatpush1.msra.mxu0 0.0
    %2043 = vmatprep.subr.mxu0 0.0
    %2044 = vmatpush1.msra.mxu0 0.0
    %2045 = vmatprep.subr.mxu0 0.0
    %2046 = vmatpush1.msra.mxu0 0.0
    %2047 = vmatprep.subr.mxu0 0.0
    %2048 = vmatpush1.msra.mxu0 0.0
    %2049 = vmatprep.subr.mxu0 0.0
    %2050 = vmatpush1.msra.mxu0 0.0
    %2051 = vmatprep.subr.mxu0 0.0
    %2052 = vmatpush1.msra.mxu0 0.0
    %2053 = vmatprep.subr.mxu0 0.0
    %2054 = vmatpush1.msra.mxu0 0.0
    %2055 = vmatprep.subr.mxu0 0.0
    %2056 = vmatpush1.msra.mxu0 0.0
    %2057 = vmatprep.subr.mxu0 0.0
    %2058 = vmatpush1.msra.mxu0 0.0
    %2059 = vmatprep.subr.mxu0 0.0
    %2060 = vmatpush1.msra.mxu0 0.0
    %2061 = vmatprep.subr.mxu0 0.0
    %2062 = vmatpush1.msra.mxu0 0.0
    %2063 = vmatprep.subr.mxu0 0.0
    %2064 = vmatpush1.msra.mxu0 0.0
    %2065 = vmatprep.subr.mxu0 0.0
    %2066 = vmatpush1.msra.mxu0 0.0
    %2067 = vmatprep.subr.mxu0 0.0
    %2068 = vmatpush1.msra.mxu0 0.0
    %2069 = vmatprep.subr.mxu0 0.0
    %2070 = vmatpush1.msra.mxu0 0.0
    %2071 = vmatprep.subr.mxu0 0.0
    %2072 = vmatpush1.msra.mxu0 0.0
    %2073 = vmatprep.subr.mxu0 0.0
    %2074 = vmatpush1.msra.mxu0 0.0
    %2075 = vmatprep.subr.mxu0 0.0
    %2076 = vmatpush1.msra.mxu0 0.0
    %2077 = vmatprep.subr.mxu0 0.0
    %2078 = vmatpush1.msra.mxu0 0.0
    %2079 = vmatprep.subr.mxu0 0.0
    %2080 = vmatpush1.msra.mxu0 0.0
    %2081 = vmatprep.subr.mxu0 0.0
    %2082 = vmatpush1.msra.mxu0 0.0
    %2083 = vmatprep.subr.mxu0 0.0
    %2084 = vmatpush1.msra.mxu0 0.0
    %2085 = vmatprep.subr.mxu0 0.0
    %2086 = vmatpush1.msra.mxu0 0.0
    %2087 = vmatprep.subr.mxu0 0.0
    %2088 = vmatpush1.msra.mxu0 0.0
    %2089 = vmatprep.subr.mxu0 0.0
    %2090 = vmatpush1.msra.mxu0 0.0
    %2091 = vmatprep.subr.mxu0 0.0
    %2092 = vmatpush1.msra.mxu0 0.0
    %2093 = vmatprep.subr.mxu0 0.0
    %2094 = vmatpush1.msra.mxu0 0.0
    %2095 = vmatprep.subr.mxu0 0.0
    %2096 = vmatpush1.msra.mxu0 0.0
    %2097 = vmatprep.subr.mxu0 0.0
    %2098 = vmatpush1.msra.mxu0 0.0
    %2099 = vmatprep.subr.mxu0 0.0
    %2100 = vmatpush1.msra.mxu0 0.0
    %2101 = vmatprep.mubr.f32.mxu0 0.0
    %v2102 = vand.u32 %v2033, 4294901760
    %v2103 = vsub.f32 %v2033, %v2102
    %v2104 = vand.u32 %v2103, 4294901760
    %v2105 = vsub.f32 %v2103, %v2104
    %v2106 = vand.u32 %v2105, 4294901760
    %2107 = vmatmul.mubr.f32.gmra.mrb[0].mxu0 %v2106
    %v2108 = vpop.f32.mrb[0].mxu0
    %v2109 = vadd.f32 %v2031, %v2108
    %v2110 = vpop.f32.mrb[0].mxu0
    %2111 = vdwg.mxu0
    %2112 = vmatprep.subr.mxu0 0.0
    %v2113 = vand.u32 %v2025, 4294901760
    %v2114 = vsub.f32 %v2025, %v2113
    %v2115 = vand.u32 %v2114, 4294901760
    %v2116 = vsub.f32 %v2114, %v2115
    %v2117 = vand.u32 %v2116, 4294901760
    %2118 = vmatpush1.msra.mxu0 %v2117
    %2119 = vmatprep.subr.mxu0 0.0
    %v2120 = vand.u32 %v2026, 4294901760
    %v2121 = vsub.f32 %v2026, %v2120
    %v2122 = vand.u32 %v2121, 4294901760
    %v2123 = vsub.f32 %v2121, %v2122
    %v2124 = vand.u32 %v2123, 4294901760
    %2125 = vmatpush1.msra.mxu0 %v2124
    %2126 = vmatprep.subr.mxu0 0.0
    %2127 = vmatpush1.msra.mxu0 0.0
    %2128 = vmatprep.subr.mxu0 0.0
    %2129 = vmatpush1.msra.mxu0 0.0
    %2130 = vmatprep.subr.mxu0 0.0
    %2131 = vmatpush1.msra.mxu0 0.0
    %2132 = vmatprep.subr.mxu0 0.0
    %2133 = vmatpush1.msra.mxu0 0.0
    %2134 = vmatprep.subr.mxu0 0.0
    %2135 = vmatpush1.msra.mxu0 0.0
    %2136 = vmatprep.subr.mxu0 0.0
    %2137 = vmatpush1.msra.mxu0 0.0
    %2138 = vmatprep.subr.mxu0 0.0
    %2139 = vmatpush1.msra.mxu0 0.0
    %2140 = vmatprep.subr.mxu0 0.0
    %2141 = vmatpush1.msra.mxu0 0.0
    %2142 = vmatprep.subr.mxu0 0.0
    %2143 = vmatpush1.msra.mxu0 0.0
    %2144 = vmatprep.subr.mxu0 0.0
    %2145 = vmatpush1.msra.mxu0 0.0
    %2146 = vmatprep.subr.mxu0 0.0
    %2147 = vmatpush1.msra.mxu0 0.0
    %2148 = vmatprep.subr.mxu0 0.0
    %2149 = vmatpush1.msra.mxu0 0.0
    %2150 = vmatprep.subr.mxu0 0.0
    %2151 = vmatpush1.msra.mxu0 0.0
    %2152 = vmatprep.subr.mxu0 0.0
    %2153 = vmatpush1.msra.mxu0 0.0
    %2154 = vmatprep.subr.mxu0 0.0
    %2155 = vmatpush1.msra.mxu0 0.0
    %2156 = vmatprep.subr.mxu0 0.0
    %2157 = vmatpush1.msra.mxu0 0.0
    %2158 = vmatprep.subr.mxu0 0.0
    %2159 = vmatpush1.msra.mxu0 0.0
    %2160 = vmatprep.subr.mxu0 0.0
    %2161 = vmatpush1.msra.mxu0 0.0
    %2162 = vmatprep.subr.mxu0 0.0
    %2163 = vmatpush1.msra.mxu0 0.0
    %2164 = vmatprep.subr.mxu0 0.0
    %2165 = vmatpush1.msra.mxu0 0.0
    %2166 = vmatprep.subr.mxu0 0.0
    %2167 = vmatpush1.msra.mxu0 0.0
    %2168 = vmatprep.subr.mxu0 0.0
    %2169 = vmatpush1.msra.mxu0 0.0
    %2170 = vmatprep.subr.mxu0 0.0
    %2171 = vmatpush1.msra.mxu0 0.0
    %2172 = vmatprep.subr.mxu0 0.0
    %2173 = vmatpush1.msra.mxu0 0.0
    %2174 = vmatprep.subr.mxu0 0.0
    %2175 = vmatpush1.msra.mxu0 0.0
    %2176 = vmatprep.subr.mxu0 0.0
    %2177 = vmatpush1.msra.mxu0 0.0
    %2178 = vmatprep.subr.mxu0 0.0
    %2179 = vmatpush1.msra.mxu0 0.0
    %2180 = vmatprep.subr.mxu0 0.0
    %2181 = vmatpush1.msra.mxu0 0.0
    %2182 = vmatprep.subr.mxu0 0.0
    %2183 = vmatpush1.msra.mxu0 0.0
    %2184 = vmatprep.subr.mxu0 0.0
    %2185 = vmatpush1.msra.mxu0 0.0
    %2186 = vmatprep.mubr.f32.mxu0 0.0
    %v2187 = vand.u32 %v2033, 4294901760
    %2188 = vmatmul.mubr.f32.gmra.mrb[0].mxu0 %v2187
    %v2189 = vpop.f32.mrb[0].mxu0
    %v2190 = vadd.f32 %v2109, %v2189
    %v2191 = vpop.f32.mrb[0].mxu0
    %2192 = vdwg.mxu0
    %2193 = vmatprep.subr.mxu0 0.0
    %v2194 = vand.u32 %v2025, 4294901760
    %v2195 = vsub.f32 %v2025, %v2194
    %2196 = vmatpush1.msra.mxu0 %v2195
    %2197 = vmatprep.subr.mxu0 0.0
    %v2198 = vand.u32 %v2026, 4294901760
    %v2199 = vsub.f32 %v2026, %v2198
    %2200 = vmatpush1.msra.mxu0 %v2199
    %2201 = vmatprep.subr.mxu0 0.0
    %2202 = vmatpush1.msra.mxu0 0.0
    %2203 = vmatprep.subr.mxu0 0.0
    %2204 = vmatpush1.msra.mxu0 0.0
    %2205 = vmatprep.subr.mxu0 0.0
    %2206 = vmatpush1.msra.mxu0 0.0
    %2207 = vmatprep.subr.mxu0 0.0
    %2208 = vmatpush1.msra.mxu0 0.0
    %2209 = vmatprep.subr.mxu0 0.0
    %2210 = vmatpush1.msra.mxu0 0.0
    %2211 = vmatprep.subr.mxu0 0.0
    %2212 = vmatpush1.msra.mxu0 0.0
    %2213 = vmatprep.subr.mxu0 0.0
    %2214 = vmatpush1.msra.mxu0 0.0
    %2215 = vmatprep.subr.mxu0 0.0
    %2216 = vmatpush1.msra.mxu0 0.0
    %2217 = vmatprep.subr.mxu0 0.0
    %2218 = vmatpush1.msra.mxu0 0.0
    %2219 = vmatprep.subr.mxu0 0.0
    %2220 = vmatpush1.msra.mxu0 0.0
    %2221 = vmatprep.subr.mxu0 0.0
    %2222 = vmatpush1.msra.mxu0 0.0
    %2223 = vmatprep.subr.mxu0 0.0
    %2224 = vmatpush1.msra.mxu0 0.0
    %2225 = vmatprep.subr.mxu0 0.0
    %2226 = vmatpush1.msra.mxu0 0.0
    %2227 = vmatprep.subr.mxu0 0.0
    %2228 = vmatpush1.msra.mxu0 0.0
    %2229 = vmatprep.subr.mxu0 0.0
    %2230 = vmatpush1.msra.mxu0 0.0
    %2231 = vmatprep.subr.mxu0 0.0
    %2232 = vmatpush1.msra.mxu0 0.0
    %2233 = vmatprep.subr.mxu0 0.0
    %2234 = vmatpush1.msra.mxu0 0.0
    %2235 = vmatprep.subr.mxu0 0.0
    %2236 = vmatpush1.msra.mxu0 0.0
    %2237 = vmatprep.subr.mxu0 0.0
    %2238 = vmatpush1.msra.mxu0 0.0
    %2239 = vmatprep.subr.mxu0 0.0
    %2240 = vmatpush1.msra.mxu0 0.0
    %2241 = vmatprep.subr.mxu0 0.0
    %2242 = vmatpush1.msra.mxu0 0.0
    %2243 = vmatprep.subr.mxu0 0.0
    %2244 = vmatpush1.msra.mxu0 0.0
    %2245 = vmatprep.subr.mxu0 0.0
    %2246 = vmatpush1.msra.mxu0 0.0
    %2247 = vmatprep.subr.mxu0 0.0
    %2248 = vmatpush1.msra.mxu0 0.0
    %2249 = vmatprep.subr.mxu0 0.0
    %2250 = vmatpush1.msra.mxu0 0.0
    %2251 = vmatprep.subr.mxu0 0.0
    %2252 = vmatpush1.msra.mxu0 0.0
    %2253 = vmatprep.subr.mxu0 0.0
    %2254 = vmatpush1.msra.mxu0 0.0
    %2255 = vmatprep.subr.mxu0 0.0
    %2256 = vmatpush1.msra.mxu0 0.0
    %2257 = vmatprep.subr.mxu0 0.0
    %2258 = vmatpush1.msra.mxu0 0.0
    %2259 = vmatprep.subr.mxu0 0.0
    %2260 = vmatpush1.msra.mxu0 0.0
    %2261 = vmatprep.mubr.f32.mxu0 0.0
    %v2262 = vand.u32 %v2033, 4294901760
    %v2263 = vsub.f32 %v2033, %v2262
    %2264 = vmatmul.mubr.f32.gmra.mrb[0].mxu0 %v2263
    %v2265 = vpop.f32.mrb[0].mxu0
    %v2266 = vadd.f32 %v2190, %v2265
    %v2267 = vpop.f32.mrb[0].mxu0
    %2268 = vdwg.mxu0
    %2269 = vmatprep.subr.mxu0 0.0
    %v2270 = vand.u32 %v2025, 4294901760
    %2271 = vmatpush1.msra.mxu0 %v2270
    %2272 = vmatprep.subr.mxu0 0.0
    %v2273 = vand.u32 %v2026, 4294901760
    %2274 = vmatpush1.msra.mxu0 %v2273
    %2275 = vmatprep.subr.mxu0 0.0
    %2276 = vmatpush1.msra.mxu0 0.0
    %2277 = vmatprep.subr.mxu0 0.0
    %2278 = vmatpush1.msra.mxu0 0.0
    %2279 = vmatprep.subr.mxu0 0.0
    %2280 = vmatpush1.msra.mxu0 0.0
    %2281 = vmatprep.subr.mxu0 0.0
    %2282 = vmatpush1.msra.mxu0 0.0
    %2283 = vmatprep.subr.mxu0 0.0
    %2284 = vmatpush1.msra.mxu0 0.0
    %2285 = vmatprep.subr.mxu0 0.0
    %2286 = vmatpush1.msra.mxu0 0.0
    %2287 = vmatprep.subr.mxu0 0.0
    %2288 = vmatpush1.msra.mxu0 0.0
    %2289 = vmatprep.subr.mxu0 0.0
    %2290 = vmatpush1.msra.mxu0 0.0
    %2291 = vmatprep.subr.mxu0 0.0
    %2292 = vmatpush1.msra.mxu0 0.0
    %2293 = vmatprep.subr.mxu0 0.0
    %2294 = vmatpush1.msra.mxu0 0.0
    %2295 = vmatprep.subr.mxu0 0.0
    %2296 = vmatpush1.msra.mxu0 0.0
    %2297 = vmatprep.subr.mxu0 0.0
    %2298 = vmatpush1.msra.mxu0 0.0
    %2299 = vmatprep.subr.mxu0 0.0
    %2300 = vmatpush1.msra.mxu0 0.0
    %2301 = vmatprep.subr.mxu0 0.0
    %2302 = vmatpush1.msra.mxu0 0.0
    %2303 = vmatprep.subr.mxu0 0.0
    %2304 = vmatpush1.msra.mxu0 0.0
    %2305 = vmatprep.subr.mxu0 0.0
    %2306 = vmatpush1.msra.mxu0 0.0
    %2307 = vmatprep.subr.mxu0 0.0
    %2308 = vmatpush1.msra.mxu0 0.0
    %2309 = vmatprep.subr.mxu0 0.0
    %2310 = vmatpush1.msra.mxu0 0.0
    %2311 = vmatprep.subr.mxu0 0.0
    %2312 = vmatpush1.msra.mxu0 0.0
    %2313 = vmatprep.subr.mxu0 0.0
    %2314 = vmatpush1.msra.mxu0 0.0
    %2315 = vmatprep.subr.mxu0 0.0
    %2316 = vmatpush1.msra.mxu0 0.0
    %2317 = vmatprep.subr.mxu0 0.0
    %2318 = vmatpush1.msra.mxu0 0.0
    %2319 = vmatprep.subr.mxu0 0.0
    %2320 = vmatpush1.msra.mxu0 0.0
    %2321 = vmatprep.subr.mxu0 0.0
    %2322 = vmatpush1.msra.mxu0 0.0
    %2323 = vmatprep.subr.mxu0 0.0
    %2324 = vmatpush1.msra.mxu0 0.0
    %2325 = vmatprep.subr.mxu0 0.0
    %2326 = vmatpush1.msra.mxu0 0.0
    %2327 = vmatprep.subr.mxu0 0.0
    %2328 = vmatpush1.msra.mxu0 0.0
    %2329 = vmatprep.subr.mxu0 0.0
    %2330 = vmatpush1.msra.mxu0 0.0
    %2331 = vmatprep.subr.mxu0 0.0
    %2332 = vmatpush1.msra.mxu0 0.0
    %2333 = vmatprep.subr.mxu0 0.0
    %2334 = vmatpush1.msra.mxu0 0.0
    %2335 = vmatprep.mubr.f32.mxu0 0.0
    %v2336 = vand.u32 %v2033, 4294901760
    %v2337 = vsub.f32 %v2033, %v2336
    %v2338 = vand.u32 %v2337, 4294901760
    %2339 = vmatmul.mubr.f32.gmra.mrb[0].mxu0 %v2338
    %v2340 = vpop.f32.mrb[0].mxu0
    %v2341 = vadd.f32 %v2266, %v2340
    %v2342 = vpop.f32.mrb[0].mxu0
    %2343 = vdwg.mxu0
    %2344 = vmatprep.subr.mxu0 0.0
    %v2345 = vand.u32 %v2025, 4294901760
    %v2346 = vsub.f32 %v2025, %v2345
    %v2347 = vand.u32 %v2346, 4294901760
    %2348 = vmatpush1.msra.mxu0 %v2347
    %2349 = vmatprep.subr.mxu0 0.0
    %v2350 = vand.u32 %v2026, 4294901760
    %v2351 = vsub.f32 %v2026, %v2350
    %v2352 = vand.u32 %v2351, 4294901760
    %2353 = vmatpush1.msra.mxu0 %v2352
    %2354 = vmatprep.subr.mxu0 0.0
    %2355 = vmatpush1.msra.mxu0 0.0
    %2356 = vmatprep.subr.mxu0 0.0
    %2357 = vmatpush1.msra.mxu0 0.0
    %2358 = vmatprep.subr.mxu0 0.0
    %2359 = vmatpush1.msra.mxu0 0.0
    %2360 = vmatprep.subr.mxu0 0.0
    %2361 = vmatpush1.msra.mxu0 0.0
    %2362 = vmatprep.subr.mxu0 0.0
    %2363 = vmatpush1.msra.mxu0 0.0
    %2364 = vmatprep.subr.mxu0 0.0
    %2365 = vmatpush1.msra.mxu0 0.0
    %2366 = vmatprep.subr.mxu0 0.0
    %2367 = vmatpush1.msra.mxu0 0.0
    %2368 = vmatprep.subr.mxu0 0.0
    %2369 = vmatpush1.msra.mxu0 0.0
    %2370 = vmatprep.subr.mxu0 0.0
    %2371 = vmatpush1.msra.mxu0 0.0
    %2372 = vmatprep.subr.mxu0 0.0
    %2373 = vmatpush1.msra.mxu0 0.0
    %2374 = vmatprep.subr.mxu0 0.0
    %2375 = vmatpush1.msra.mxu0 0.0
    %2376 = vmatprep.subr.mxu0 0.0
    %2377 = vmatpush1.msra.mxu0 0.0
    %2378 = vmatprep.subr.mxu0 0.0
    %2379 = vmatpush1.msra.mxu0 0.0
    %2380 = vmatprep.subr.mxu0 0.0
    %2381 = vmatpush1.msra.mxu0 0.0
    %2382 = vmatprep.subr.mxu0 0.0
    %2383 = vmatpush1.msra.mxu0 0.0
    %2384 = vmatprep.subr.mxu0 0.0
    %2385 = vmatpush1.msra.mxu0 0.0
    %2386 = vmatprep.subr.mxu0 0.0
    %2387 = vmatpush1.msra.mxu0 0.0
    %2388 = vmatprep.subr.mxu0 0.0
    %2389 = vmatpush1.msra.mxu0 0.0
    %2390 = vmatprep.subr.mxu0 0.0
    %2391 = vmatpush1.msra.mxu0 0.0
    %2392 = vmatprep.subr.mxu0 0.0
    %2393 = vmatpush1.msra.mxu0 0.0
    %2394 = vmatprep.subr.mxu0 0.0
    %2395 = vmatpush1.msra.mxu0 0.0
    %2396 = vmatprep.subr.mxu0 0.0
    %2397 = vmatpush1.msra.mxu0 0.0
    %2398 = vmatprep.subr.mxu0 0.0
    %2399 = vmatpush1.msra.mxu0 0.0
    %2400 = vmatprep.subr.mxu0 0.0
    %2401 = vmatpush1.msra.mxu0 0.0
    %2402 = vmatprep.subr.mxu0 0.0
    %2403 = vmatpush1.msra.mxu0 0.0
    %2404 = vmatprep.subr.mxu0 0.0
    %2405 = vmatpush1.msra.mxu0 0.0
    %2406 = vmatprep.subr.mxu0 0.0
    %2407 = vmatpush1.msra.mxu0 0.0
    %2408 = vmatprep.subr.mxu0 0.0
    %2409 = vmatpush1.msra.mxu0 0.0
    %2410 = vmatprep.subr.mxu0 0.0
    %2411 = vmatpush1.msra.mxu0 0.0
    %2412 = vmatprep.subr.mxu0 0.0
    %2413 = vmatpush1.msra.mxu0 0.0
    %2414 = vmatprep.mubr.f32.mxu0 0.0
    %v2415 = vand.u32 %v2033, 4294901760
    %2416 = vmatmul.mubr.f32.gmra.mrb[0].mxu0 %v2415
    %v2417 = vpop.f32.mrb[0].mxu0
    %v2418 = vadd.f32 %v2341, %v2417
    %v2419 = vpop.f32.mrb[0].mxu0
    %2420 = vdwg.mxu0
    %2421 = vmatprep.subr.mxu0 0.0
    %v2422 = vand.u32 %v2025, 4294901760
    %2423 = vmatpush1.msra.mxu0 %v2422
    %2424 = vmatprep.subr.mxu0 0.0
    %v2425 = vand.u32 %v2026, 4294901760
    %2426 = vmatpush1.msra.mxu0 %v2425
    %2427 = vmatprep.subr.mxu0 0.0
    %2428 = vmatpush1.msra.mxu0 0.0
    %2429 = vmatprep.subr.mxu0 0.0
    %2430 = vmatpush1.msra.mxu0 0.0
    %2431 = vmatprep.subr.mxu0 0.0
    %2432 = vmatpush1.msra.mxu0 0.0
    %2433 = vmatprep.subr.mxu0 0.0
    %2434 = vmatpush1.msra.mxu0 0.0
    %2435 = vmatprep.subr.mxu0 0.0
    %2436 = vmatpush1.msra.mxu0 0.0
    %2437 = vmatprep.subr.mxu0 0.0
    %2438 = vmatpush1.msra.mxu0 0.0
    %2439 = vmatprep.subr.mxu0 0.0
    %2440 = vmatpush1.msra.mxu0 0.0
    %2441 = vmatprep.subr.mxu0 0.0
    %2442 = vmatpush1.msra.mxu0 0.0
    %2443 = vmatprep.subr.mxu0 0.0
    %2444 = vmatpush1.msra.mxu0 0.0
    %2445 = vmatprep.subr.mxu0 0.0
    %2446 = vmatpush1.msra.mxu0 0.0
    %2447 = vmatprep.subr.mxu0 0.0
    %2448 = vmatpush1.msra.mxu0 0.0
    %2449 = vmatprep.subr.mxu0 0.0
    %2450 = vmatpush1.msra.mxu0 0.0
    %2451 = vmatprep.subr.mxu0 0.0
    %2452 = vmatpush1.msra.mxu0 0.0
    %2453 = vmatprep.subr.mxu0 0.0
    %2454 = vmatpush1.msra.mxu0 0.0
    %2455 = vmatprep.subr.mxu0 0.0
    %2456 = vmatpush1.msra.mxu0 0.0
    %2457 = vmatprep.subr.mxu0 0.0
    %2458 = vmatpush1.msra.mxu0 0.0
    %2459 = vmatprep.subr.mxu0 0.0
    %2460 = vmatpush1.msra.mxu0 0.0
    %2461 = vmatprep.subr.mxu0 0.0
    %2462 = vmatpush1.msra.mxu0 0.0
    %2463 = vmatprep.subr.mxu0 0.0
    %2464 = vmatpush1.msra.mxu0 0.0
    %2465 = vmatprep.subr.mxu0 0.0
    %2466 = vmatpush1.msra.mxu0 0.0
    %2467 = vmatprep.subr.mxu0 0.0
    %2468 = vmatpush1.msra.mxu0 0.0
    %2469 = vmatprep.subr.mxu0 0.0
    %2470 = vmatpush1.msra.mxu0 0.0
    %2471 = vmatprep.subr.mxu0 0.0
    %2472 = vmatpush1.msra.mxu0 0.0
    %2473 = vmatprep.subr.mxu0 0.0
    %2474 = vmatpush1.msra.mxu0 0.0
    %2475 = vmatprep.subr.mxu0 0.0
    %2476 = vmatpush1.msra.mxu0 0.0
    %2477 = vmatprep.subr.mxu0 0.0
    %2478 = vmatpush1.msra.mxu0 0.0
    %2479 = vmatprep.subr.mxu0 0.0
    %2480 = vmatpush1.msra.mxu0 0.0
    %2481 = vmatprep.subr.mxu0 0.0
    %2482 = vmatpush1.msra.mxu0 0.0
    %2483 = vmatprep.subr.mxu0 0.0
    %2484 = vmatpush1.msra.mxu0 0.0
    %2485 = vmatprep.subr.mxu0 0.0
    %2486 = vmatpush1.msra.mxu0 0.0
    %2487 = vmatprep.mubr.f32.mxu0 0.0
    %v2488 = vand.u32 %v2033, 4294901760
    %2489 = vmatmul.mubr.f32.gmra.mrb[0].mxu0 %v2488
    %v2490 = vpop.f32.mrb[0].mxu0
    %v2491 = vadd.f32 %v2418, %v2490
    %v2492 = vpop.f32.mrb[0].mxu0
    %2493 = vdwg.mxu0
    %2494 = vst.msk [vmem:[#allocation5] sm:$0xff] %vm1040, %v2491
    %2495 = vst.msk [vmem:[#allocation6] sm:$0xff] %vm54, %v2024
    %2496 = vst.msk [vmem:[#allocation8] sm:$0xff] %vm54, %v2022
    // Predicated region
    $region26: #{lstm_decoder_forward.1} parent=1 // pred_check
      _
    $region27: #{lstm_decoder_forward.1} parent=1 // pred_check_branch
      %2498 = sbr.rel (0) target = $region29
    $region28: #{lstm_decoder_forward.1} parent=1 // pred_region
      %s2500 = ssub.s32 128, 128
      %2501 = vsyncadd [#allocation4], %s2500
      %s2503 = sshll.u32 [#allocation5], 4
      %s2504 = int_to_ptr.vmem [resolvable:$true] %s2503
      %2506 = dma.vmem_to_hbm [thread:$0]  %s2504, 128, %s5, [#allocation4]
    $region29: #{lstm_decoder_forward.1} parent=1 // pred_fallthru
      _
    // Predicated region
    $region30: #{lstm_decoder_forward.1} parent=1 // pred_check
      _
    $region31: #{lstm_decoder_forward.1} parent=1 // pred_check_branch
      %2508 = sbr.rel (0) target = $region33
    $region32: #{lstm_decoder_forward.1} parent=1 // pred_region
      %s2510 = ssub.s32 128, 128
      %2511 = vsyncadd [#allocation7], %s2510
      %s2513 = sshll.u32 [#allocation6], 4
      %s2514 = int_to_ptr.vmem [resolvable:$true] %s2513
      %2516 = dma.vmem_to_hbm [thread:$0]  %s2514, 128, %s6, [#allocation7]
    $region33: #{lstm_decoder_forward.1} parent=1 // pred_fallthru
      _
    // Predicated region
    $region34: #{lstm_decoder_forward.1} parent=1 // pred_check
      _
    $region35: #{lstm_decoder_forward.1} parent=1 // pred_check_branch
      %2518 = sbr.rel (0) target = $region37
    $region36: #{lstm_decoder_forward.1} parent=1 // pred_region
      %s2520 = ssub.s32 128, 128
      %2521 = vsyncadd [#allocation7], %s2520
      %s2523 = sshll.u32 [#allocation8], 4
      %s2524 = int_to_ptr.vmem [resolvable:$true] %s2523
      %2526 = dma.vmem_to_hbm [thread:$0]  %s2524, 128, %s7, [#allocation7]
    $region37: #{lstm_decoder_forward.1} parent=1 // pred_fallthru
      _
    // Predicated region
    $region38: #{lstm_decoder_forward.1} parent=1 // pred_check
      _
    $region39: #{lstm_decoder_forward.1} parent=1 // pred_check_branch
      %2528 = sbr.rel (0) target = $region41
    $region40: #{lstm_decoder_forward.1} parent=1 // pred_region
      %2529 = dma.done [#allocation4], 128
    $region41: #{lstm_decoder_forward.1} parent=1 // pred_fallthru
      _
    // Predicated region
    $region42: #{lstm_decoder_forward.1} parent=1 // pred_check
      _
    $region43: #{lstm_decoder_forward.1} parent=1 // pred_check_branch
      %2531 = sbr.rel (0) target = $region45
    $region44: #{lstm_decoder_forward.1} parent=1 // pred_region
      %2532 = dma.done [#allocation7], 128
    $region45: #{lstm_decoder_forward.1} parent=1 // pred_fallthru
      _
    // Predicated region
    $region46: #{lstm_decoder_forward.1} parent=1 // pred_check
      _
    $region47: #{lstm_decoder_forward.1} parent=1 // pred_check_branch
      %2534 = sbr.rel (0) target = $region49
    $region48: #{lstm_decoder_forward.1} parent=1 // pred_region
      %2535 = dma.done [#allocation7], 128
    $region49: #{lstm_decoder_forward.1} parent=1 // pred_fallthru
      _
    %2536 = vsyncpa [#allocation3], 1
    %2537 = vsyncpa [#allocation4], 1
    %2538 = vsyncpa [#allocation7], 1

</llo_original>
